<compile_context>
chip_gen: v6e
topology: v6e:2x2x1
jax: 0.10.0
libtpu: 0.0.40
codegen_flags: <defaults>
</compile_context>

<pallas_src>
import jax
import jax.numpy as jnp
from jax.experimental import pallas as pl
from jax.experimental.pallas import tpu as pltpu


# --------------------------------------------------------------------------------------
# Parameter / input preparation (XLA side)
# --------------------------------------------------------------------------------------
def init_convlstm_params(key, input_channels, hidden_channels, kernel_size):
    """Synthetic weights with the PyTorch module's parameter shapes.

    Returns (packed, raw, key):
      packed[l] = {"w": [4*Ch, K*K*(Cin+Ch)] bf16, "b": [4*Ch, 1] f32}   (kernel layout)
      raw[l]    = {"wx": [4,Ch,Cin,K,K], "wh": [4,Ch,Ch,K,K], "bx": [4,Ch]} f32
                  (torch Conv2d OIHW layout per gate, for the pure-JAX reference).
    Gate order is (i, f, c, o) everywhere.
    """
    K = kernel_size
    in_chs = [input_channels] + list(hidden_channels)
    packed, raw = [], []
    for li, Ch in enumerate(hidden_channels):
        Cin = in_chs[li]
        wx_g, wh_g, b_g = [], [], []
        for _gate in range(4):                              # (i, f, c, o)
            key, k1, k2, k3 = jax.random.split(key, 4)
            wx_g.append(0.1 * jax.random.normal(k1, (Ch, Cin, K, K), jnp.float32))
            wh_g.append(0.1 * jax.random.normal(k2, (Ch, Ch, K, K), jnp.float32))
            b_g.append(0.1 * jax.random.normal(k3, (Ch,), jnp.float32))
        wx = jnp.stack(wx_g)                                # [4, Ch, Cin, K, K]
        wh = jnp.stack(wh_g)                                # [4, Ch, Ch,  K, K]
        bx = jnp.stack(b_g)                                 # [4, Ch]  (only Wx* convs have bias)
        # Pack for the fused matmul: rows = gate-major output channels,
        # cols = x taps then h taps, each tap block ordered (ky*K + kx)*C + c.
        wxp = jnp.transpose(wx, (0, 1, 3, 4, 2)).reshape(4 * Ch, K * K * Cin)
        whp = jnp.transpose(wh, (0, 1, 3, 4, 2)).reshape(4 * Ch, K * K * Ch)
        packed.append({
            "w": jnp.concatenate([wxp, whp], axis=1).astype(jnp.bfloat16),
            "b": bx.reshape(4 * Ch, 1),
        })
        raw.append({"wx": wx, "wh": wh, "bx": bx})
    return packed, raw, key


def _im2col_seq(x, K):
    """[T, B, C, H, W] -> [T, B, K*K*C, H*W]; rows ordered (ky*K + kx)*C + c."""
    T, B, C, H, W = x.shape
    p = (K - 1) // 2
    xp = jnp.pad(x, ((0, 0), (0, 0), (0, 0), (p, p), (p, p)))
    taps = [xp[:, :, :, ky:ky + H, kx:kx + W] for ky in range(K) for kx in range(K)]
    pat = jnp.stack(taps, axis=2)                           # [T, B, K*K, C, H, W]
    return pat.reshape(T, B, K * K * C, H * W)


def _conv_masks(H, W, K):
    """[K*K, 1, H*W] f32 validity masks implementing 'same' zero padding for the h taps."""
    p = (K - 1) // 2
    i = jnp.arange(H * W) // W
    j = jnp.arange(H * W) % W
    rows = []
    for ky in range(K):
        for kx in range(K):
            dy, dx = ky - p, kx - p
            ok = (i + dy >= 0) & (i + dy < H) & (j + dx >= 0) & (j + dx < W)
            rows.append(ok.astype(jnp.float32))
    return jnp.stack(rows, axis=0).reshape(K * K, 1, H * W)


# --------------------------------------------------------------------------------------
# Pallas kernel: one ConvLSTM layer over the full time axis
# --------------------------------------------------------------------------------------
def _make_layer_kernel(H, W, K, KKC, Ch, guard):
    HW = H * W
    p = (K - 1) // 2

    def kernel(xpat_ref, h0_ref, c0_ref, w_ref, b_ref, m_ref,
               hseq_ref, cfin_ref, hg_s, c_s, pat_s):
        t = pl.program_id(1)

        @pl.when(t == 0)
        def _init():
            # zero the guard bands once; interior <- initial hidden state (VMEM resident)
            hg_s[...] = jnp.zeros_like(hg_s)
            hg_s[:, guard:guard + HW] = h0_ref[0]
            c_s[...] = c0_ref[0]

        # ---------- fused im2col patch matrix [K*K*(Cin+Ch), H*W] ----------
        # x taps were im2col'ed on the XLA side and streamed per timestep (bf16 DMA).
        pat_s[0:KKC, :] = xpat_ref[0, 0].astype(jnp.float32)
        # h taps: static lane-shifted views of the guarded flat hidden state, masked at
        # the image borders ('same' zero padding without any per-step pad / gather).
        hg = hg_s[...]                                       # [Ch, HW + 2*guard]
        for ky in range(K):
            for kx in range(K):
                idx = ky * K + kx
                start = guard - p * (W + 1) + ky * W + kx
                shifted = hg[:, start:start + HW]            # [Ch, HW]
                pat_s[KKC + idx * Ch:KKC + (idx + 1) * Ch, :] = shifted * m_ref[idx]

        # ---------- all 4 gates (i, f, c, o) in ONE bf16 MXU matmul, f32 accumulate ----
        acc = jnp.dot(w_ref[...], pat_s[...].astype(jnp.bfloat16),
                      preferred_element_type=jnp.float32) + b_ref[...]   # [4*Ch, HW]

        c_prev = c_s[...]
        gi = acc[0 * Ch:1 * Ch, :]
        gf = acc[1 * Ch:2 * Ch, :]
        gc = acc[2 * Ch:3 * Ch, :]
        go = acc[3 * Ch:4 * Ch, :]
        # peephole terms omitted: Wci = Wcf = Wco = 0 from init_hidden()
        ci = jax.nn.sigmoid(gi)
        cf = jax.nn.sigmoid(gf)
        cc = cf * c_prev + ci * jnp.tanh(gc)
        co = jax.nn.sigmoid(go)
        ch = co * jnp.tanh(cc)

        # recurrent state stays hot in VMEM
        c_s[...] = cc
        hg_s[:, guard:guard + HW] = ch
        # lane-dense outputs ([Ch, H*W]; H*W is a multiple of 128 lanes)
        hseq_ref[0, 0] = ch
        cfin_ref[0] = cc

    return kernel


def _convlstm_layer(xpat_seq, h0, c0, masks, w, b, *, H, W, K):
    """One layer over the whole sequence: grid = (B, T), recurrent state in VMEM scratch."""
    T, B, KKC, HW = xpat_seq.shape
    Ch = h0.shape[1]
    Kdim = w.shape[1]
    KK = K * K
    p = (K - 1) // 2
    guard = ((p * (W + 1) + 127) // 128) * 128               # lane-aligned guard >= p*(W+1)

    kernel = _make_layer_kernel(H, W, K, KKC, Ch, guard)

    # VMEM budget derived from the actual per-step tile footprint (double-buffered blocks
    # + scratch) with generous headroom; stays far below v7x's 64 MiB at these shapes.
    blk_bytes = (KKC * HW * 2 + 2 * Ch * HW * 4 + 4 * Ch * Kdim * 2 + 4 * Ch * 4
                 + KK * HW * 4 + 2 * Ch * HW * 4)
    scratch_bytes = Ch * (HW + 2 * guard) * 4 + Ch * HW * 4 + Kdim * HW * 4
    vmem_limit = int(min(100 * 1024 * 1024,
                         max(16 * 1024 * 1024, 8 * (2 * blk_bytes + scratch_bytes))))

    hseq, cfin = pl.pallas_call(
        kernel,
        out_shape=(jax.ShapeDtypeStruct((T, B, Ch, HW), jnp.float32),
                   jax.ShapeDtypeStruct((B, Ch, HW), jnp.float32)),
        grid_spec=pltpu.PrefetchScalarGridSpec(
            num_scalar_prefetch=0,
            grid=(B, T),
            in_specs=[
                pl.BlockSpec((1, 1, KKC, HW), lambda bb, tt: (tt, bb, 0, 0)),   # x taps
                pl.BlockSpec((1, Ch, HW), lambda bb, tt: (bb, 0, 0)),           # h0
                pl.BlockSpec((1, Ch, HW), lambda bb, tt: (bb, 0, 0)),           # c0
                pl.BlockSpec((4 * Ch, Kdim), lambda bb, tt: (0, 0)),            # packed W (bf16)
                pl.BlockSpec((4 * Ch, 1), lambda bb, tt: (0, 0)),               # bias
                pl.BlockSpec((KK, 1, HW), lambda bb, tt: (0, 0, 0)),            # border masks
            ],
            out_specs=(
                pl.BlockSpec((1, 1, Ch, HW), lambda bb, tt: (tt, bb, 0, 0)),    # h sequence
                pl.BlockSpec((1, Ch, HW), lambda bb, tt: (bb, 0, 0)),           # final c
            ),
            scratch_shapes=[
                pltpu.VMEM((Ch, HW + 2 * guard), jnp.float32),   # guarded flat h state
                pltpu.VMEM((Ch, HW), jnp.float32),               # cell state c
                pltpu.VMEM((Kdim, HW), jnp.float32),             # fused im2col patches
            ],
        ),
        compiler_params=pltpu.CompilerParams(
            # batch axis 'parallel' (uses both TCs on v7x); time axis is the recurrence.
            dimension_semantics=("parallel", "arbitrary"),
            vmem_limit_bytes=vmem_limit,
        ),
    )(xpat_seq, h0, c0, w, b, masks)
    return hseq, cfin


# --------------------------------------------------------------------------------------
# Full forward  (== calling ConvLSTM.forward(x_t, t) for t = 0..T-1, under one jit)
# --------------------------------------------------------------------------------------
def convlstm_forward_sequence(x_seq, params, init_states, kernel_size):
    """x_seq: [T, B, Cin, H, W] (NCHW per step).  Returns (outputs [T, B, Ch_last, H, W],
    (h_last, c_last)) -- the torch module's per-step `outputs` plus its final state."""
    T, B, _, H, W = x_seq.shape
    K = kernel_size
    masks = _conv_masks(H, W, K)

    x = x_seq
    hseq = cfin = None
    for li, prm in enumerate(params):
        xpat = _im2col_seq(x, K).astype(jnp.bfloat16)        # [T, B, K*K*C, H*W]
        h0, c0 = init_states[li]                             # [B, Ch, H, W]
        Ch = h0.shape[1]
        hseq, cfin = _convlstm_layer(
            xpat, h0.reshape(B, Ch, H * W), c0.reshape(B, Ch, H * W),
            masks, prm["w"], prm["b"], H=H, W=W, K=K)
        x = hseq.reshape(T, B, Ch, H, W)                     # next layer's input (NCHW)

    outputs = x                                              # last layer, every timestep
    c_last = cfin.reshape(B, -1, H, W)
    return outputs, (outputs[-1], c_last)


# --------------------------------------------------------------------------------------
# Pure-JAX reference (independent path through lax.conv) for a numerical check
# --------------------------------------------------------------------------------------
def _reference_forward(x_seq, raw_params, init_states, kernel_size):
    """Mirror of the PyTorch ConvLSTM forward; conv inputs/weights rounded to bf16
    exactly like the Pallas kernel (f32 gate & state math)."""
    K = kernel_size
    p = (K - 1) // 2
    dn = ("NCHW", "OIHW", "NCHW")

    def conv(inp, wgt):
        return jax.lax.conv_general_dilated(
            inp.astype(jnp.bfloat16).astype(jnp.float32),
            wgt.astype(jnp.bfloat16).astype(jnp.float32),
            (1, 1), [(p, p), (p, p)], dimension_numbers=dn,
            precision=jax.lax.Precision.HIGHEST)

    states = list(init_states)
    outs = []
    for t in range(x_seq.shape[0]):
        x = x_seq[t]
        for li, rp in enumerate(raw_params):
            h, c = states[li]
            wx, wh, bx = rp["wx"], rp["wh"], rp["bx"]
            gates = [conv(x, wx[g]) + conv(h, wh[g]) + bx[g][None, :, None, None]
                     for g in range(4)]                      # (i, f, c, o)
            ci = jax.nn.sigmoid(gates[0])                    # Wci == 0
            cf = jax.nn.sigmoid(gates[1])                    # Wcf == 0
            cc = cf * c + ci * jnp.tanh(gates[2])
            co = jax.nn.sigmoid(gates[3])                    # Wco == 0
            ch = co * jnp.tanh(cc)
            states[li] = (ch, cc)
            x = ch
        outs.append(x)
    return jnp.stack(outs, axis=0), states[-1]


if __name__ == "__main__":
    B, Cin, H, W = 2, 4, 16, 16
    hidden_channels = [8, 16]
    K = 3
    T = 8

    key = jax.random.PRNGKey(0)
    packed, raw, key = init_convlstm_params(key, Cin, hidden_channels, K)

    # init_hidden(): random initial h, c per layer (peephole Wci/Wcf/Wco are zeros).
    init_states = []
    for Ch in hidden_channels:
        key, k1, k2 = jax.random.split(key, 3)
        init_states.append((jax.random.normal(k1, (B, Ch, H, W), jnp.float32),
                            jax.random.normal(k2, (B, Ch, H, W), jnp.float32)))

    key, kx = jax.random.split(key)
    x_seq = jax.random.normal(kx, (T, B, Cin, H, W), jnp.float32)

    fwd = jax.jit(convlstm_forward_sequence, static_argnames=("kernel_size",))
    outputs, (h_last, c_last) = fwd(x_seq, packed, init_states, kernel_size=K)
    jax.block_until_ready((outputs, h_last, c_last))

    assert outputs.shape == (T, B, hidden_channels[-1], H, W)
    assert h_last.shape == (B, hidden_channels[-1], H, W)
    assert c_last.shape == (B, hidden_channels[-1], H, W)

    # Numerical check against an independent pure-JAX mirror of the PyTorch module.
    ref_out, (ref_h, ref_c) = _reference_forward(x_seq, raw, init_states, K)
    err_h = float(jnp.max(jnp.abs(outputs - ref_out)))
    err_c = float(jnp.max(jnp.abs(c_last - ref_c)))
    assert err_h < 5e-3 and err_c < 5e-3, (err_h, err_c)

    print("KERNEL_OK")
</pallas_src>

<mosaic_0001>
module attributes {stable_mosaic.version = 11 : i64} {
  func.func @kernel(%arg0: i32, %arg1: i32, %arg2: memref<1x1x36x256xbf16, #tpu.memory_space<vmem>>, %arg3: memref<1x8x256xf32, #tpu.memory_space<vmem>>, %arg4: memref<1x8x256xf32, #tpu.memory_space<vmem>>, %arg5: memref<32x108xbf16, #tpu.memory_space<vmem>>, %arg6: memref<32x1xf32, #tpu.memory_space<vmem>>, %arg7: memref<9x1x256xf32, #tpu.memory_space<vmem>>, %arg8: memref<1x1x8x256xf32, #tpu.memory_space<vmem>>, %arg9: memref<1x8x256xf32, #tpu.memory_space<vmem>>, %arg10: memref<8x512xf32, #tpu.memory_space<vmem>>, %arg11: memref<8x256xf32, #tpu.memory_space<vmem>>, %arg12: memref<108x256xf32, #tpu.memory_space<vmem>>) attributes {dimension_semantics = [#tpu.dimension_semantics<parallel>, #tpu.dimension_semantics<arbitrary>], iteration_bounds = array<i64: 2, 8>, scalar_prefetch = 0 : i64, scratch_operands = 3 : i64, tpu.core_type = #tpu.core_type<tc>, window_params = [{transform_indices = @transform_0, window_bounds = array<i64: 1, 1, 36, 256>}, {transform_indices = @transform_1, window_bounds = array<i64: 1, 8, 256>}, {transform_indices = @transform_2, window_bounds = array<i64: 1, 8, 256>}, {pipeline_mode = #tpu.pipeline_mode<synchronous>, transform_indices = @transform_3, window_bounds = array<i64: 32, 108>}, {pipeline_mode = #tpu.pipeline_mode<synchronous>, transform_indices = @transform_4, window_bounds = array<i64: 32, 1>}, {pipeline_mode = #tpu.pipeline_mode<synchronous>, transform_indices = @transform_5, window_bounds = array<i64: 9, 1, 256>}, {transform_indices = @transform_6, window_bounds = array<i64: 1, 1, 8, 256>}, {transform_indices = @transform_7, window_bounds = array<i64: 1, 8, 256>}]} {
    %c0_i32 = arith.constant 0 : i32
    %0 = arith.cmpi eq, %arg1, %c0_i32 : i32
    %1 = arith.extui %0 : i1 to i32
    %c0_i32_0 = arith.constant 0 : i32
    %2 = arith.cmpi ne, %1, %c0_i32_0 : i32
    scf.if %2 {
      %cst_57 = arith.constant 0.000000e+00 : f32
      %103 = vector.broadcast %cst_57 : f32 to vector<8x512xf32>
      %c0_58 = arith.constant 0 : index
      %c0_59 = arith.constant 0 : index
      %104 = vector.load %arg10[%c0_58, %c0_59] : memref<8x512xf32, #tpu.memory_space<vmem>>, vector<8x512xf32>
      tpu.vector_store %arg10[%c0_58, %c0_59], %103 {strides = array<i32>} : memref<8x512xf32, #tpu.memory_space<vmem>>, vector<8x512xf32>,
      %c0_60 = arith.constant 0 : index
      %c0_61 = arith.constant 0 : index
      %c0_62 = arith.constant 0 : index
      %105 = vector.load %arg3[%c0_60, %c0_61, %c0_62] : memref<1x8x256xf32, #tpu.memory_space<vmem>>, vector<1x8x256xf32>
      %106 = vector.shape_cast %105 : vector<1x8x256xf32> to vector<8x256xf32>
      %c0_63 = arith.constant 0 : index
      %c128_64 = arith.constant 128 : index
      %107 = vector.load %arg10[%c0_63, %c128_64] : memref<8x512xf32, #tpu.memory_space<vmem>>, vector<8x256xf32>
      tpu.vector_store %arg10[%c0_63, %c128_64], %106 {strides = array<i32>} : memref<8x512xf32, #tpu.memory_space<vmem>>, vector<8x256xf32>,
      %c0_65 = arith.constant 0 : index
      %c0_66 = arith.constant 0 : index
      %c0_67 = arith.constant 0 : index
      %108 = vector.load %arg4[%c0_65, %c0_66, %c0_67] : memref<1x8x256xf32, #tpu.memory_space<vmem>>, vector<1x8x256xf32>
      %109 = vector.shape_cast %108 : vector<1x8x256xf32> to vector<8x256xf32>
      %c0_68 = arith.constant 0 : index
      %c0_69 = arith.constant 0 : index
      %110 = vector.load %arg11[%c0_68, %c0_69] : memref<8x256xf32, #tpu.memory_space<vmem>>, vector<8x256xf32>
      tpu.vector_store %arg11[%c0_68, %c0_69], %109 {strides = array<i32>} : memref<8x256xf32, #tpu.memory_space<vmem>>, vector<8x256xf32>,
    } else {
    }
    %c0 = arith.constant 0 : index
    %c0_1 = arith.constant 0 : index
    %c0_2 = arith.constant 0 : index
    %c0_3 = arith.constant 0 : index
    %3 = vector.load %arg2[%c0, %c0_1, %c0_2, %c0_3] : memref<1x1x36x256xbf16, #tpu.memory_space<vmem>>, vector<1x1x36x256xbf16>
    %4 = vector.shape_cast %3 : vector<1x1x36x256xbf16> to vector<36x256xbf16>
    %5 = arith.extf %4 : vector<36x256xbf16> to vector<36x256xf32>
    %c0_4 = arith.constant 0 : index
    %c0_5 = arith.constant 0 : index
    %6 = vector.load %arg12[%c0_4, %c0_5] : memref<108x256xf32, #tpu.memory_space<vmem>>, vector<36x256xf32>
    tpu.vector_store %arg12[%c0_4, %c0_5], %5 {strides = array<i32>} : memref<108x256xf32, #tpu.memory_space<vmem>>, vector<36x256xf32>,
    %c0_6 = arith.constant 0 : index
    %c0_7 = arith.constant 0 : index
    %7 = vector.load %arg10[%c0_6, %c0_7] : memref<8x512xf32, #tpu.memory_space<vmem>>, vector<8x512xf32>
    %8 = vector.extract_strided_slice %7 {offsets = [0, 111], sizes = [8, 256], strides = [1, 1]} : vector<8x512xf32> to vector<8x256xf32>
    %c0_8 = arith.constant 0 : index
    %c0_9 = arith.constant 0 : index
    %c0_10 = arith.constant 0 : index
    %9 = vector.load %arg7[%c0_8, %c0_9, %c0_10] : memref<9x1x256xf32, #tpu.memory_space<vmem>>, vector<1x1x256xf32>
    %10 = vector.shape_cast %9 : vector<1x1x256xf32> to vector<1x256xf32>
    %11 = vector.broadcast %10 : vector<1x256xf32> to vector<8x256xf32>
    %12 = arith.mulf %8, %11 : vector<8x256xf32>
    %c36 = arith.constant 36 : index
    %c0_11 = arith.constant 0 : index
    %13 = vector.load %arg12[%c36, %c0_11] : memref<108x256xf32, #tpu.memory_space<vmem>>, vector<8x256xf32>
    tpu.vector_store %arg12[%c36, %c0_11], %12 {strides = array<i32>} : memref<108x256xf32, #tpu.memory_space<vmem>>, vector<8x256xf32>,
    %14 = vector.extract_strided_slice %7 {offsets = [0, 112], sizes = [8, 256], strides = [1, 1]} : vector<8x512xf32> to vector<8x256xf32>
    %c1 = arith.constant 1 : index
    %c0_12 = arith.constant 0 : index
    %c0_13 = arith.constant 0 : index
    %15 = vector.load %arg7[%c1, %c0_12, %c0_13] : memref<9x1x256xf32, #tpu.memory_space<vmem>>, vector<1x1x256xf32>
    %16 = vector.shape_cast %15 : vector<1x1x256xf32> to vector<1x256xf32>
    %17 = vector.broadcast %16 : vector<1x256xf32> to vector<8x256xf32>
    %18 = arith.mulf %14, %17 : vector<8x256xf32>
    %c44 = arith.constant 44 : index
    %c0_14 = arith.constant 0 : index
    %19 = vector.load %arg12[%c44, %c0_14] : memref<108x256xf32, #tpu.memory_space<vmem>>, vector<8x256xf32>
    tpu.vector_store %arg12[%c44, %c0_14], %18 {strides = array<i32>} : memref<108x256xf32, #tpu.memory_space<vmem>>, vector<8x256xf32>,
    %20 = vector.extract_strided_slice %7 {offsets = [0, 113], sizes = [8, 256], strides = [1, 1]} : vector<8x512xf32> to vector<8x256xf32>
    %c2 = arith.constant 2 : index
    %c0_15 = arith.constant 0 : index
    %c0_16 = arith.constant 0 : index
    %21 = vector.load %arg7[%c2, %c0_15, %c0_16] : memref<9x1x256xf32, #tpu.memory_space<vmem>>, vector<1x1x256xf32>
    %22 = vector.shape_cast %21 : vector<1x1x256xf32> to vector<1x256xf32>
    %23 = vector.broadcast %22 : vector<1x256xf32> to vector<8x256xf32>
    %24 = arith.mulf %20, %23 : vector<8x256xf32>
    %c52 = arith.constant 52 : index
    %c0_17 = arith.constant 0 : index
    %25 = vector.load %arg12[%c52, %c0_17] : memref<108x256xf32, #tpu.memory_space<vmem>>, vector<8x256xf32>
    tpu.vector_store %arg12[%c52, %c0_17], %24 {strides = array<i32>} : memref<108x256xf32, #tpu.memory_space<vmem>>, vector<8x256xf32>,
    %26 = vector.extract_strided_slice %7 {offsets = [0, 127], sizes = [8, 256], strides = [1, 1]} : vector<8x512xf32> to vector<8x256xf32>
    %c3 = arith.constant 3 : index
    %c0_18 = arith.constant 0 : index
    %c0_19 = arith.constant 0 : index
    %27 = vector.load %arg7[%c3, %c0_18, %c0_19] : memref<9x1x256xf32, #tpu.memory_space<vmem>>, vector<1x1x256xf32>
    %28 = vector.shape_cast %27 : vector<1x1x256xf32> to vector<1x256xf32>
    %29 = vector.broadcast %28 : vector<1x256xf32> to vector<8x256xf32>
    %30 = arith.mulf %26, %29 : vector<8x256xf32>
    %c60 = arith.constant 60 : index
    %c0_20 = arith.constant 0 : index
    %31 = vector.load %arg12[%c60, %c0_20] : memref<108x256xf32, #tpu.memory_space<vmem>>, vector<8x256xf32>
    tpu.vector_store %arg12[%c60, %c0_20], %30 {strides = array<i32>} : memref<108x256xf32, #tpu.memory_space<vmem>>, vector<8x256xf32>,
    %32 = vector.extract_strided_slice %7 {offsets = [0, 128], sizes = [8, 256], strides = [1, 1]} : vector<8x512xf32> to vector<8x256xf32>
    %c4 = arith.constant 4 : index
    %c0_21 = arith.constant 0 : index
    %c0_22 = arith.constant 0 : index
    %33 = vector.load %arg7[%c4, %c0_21, %c0_22] : memref<9x1x256xf32, #tpu.memory_space<vmem>>, vector<1x1x256xf32>
    %34 = vector.shape_cast %33 : vector<1x1x256xf32> to vector<1x256xf32>
    %35 = vector.broadcast %34 : vector<1x256xf32> to vector<8x256xf32>
    %36 = arith.mulf %32, %35 : vector<8x256xf32>
    %c68 = arith.constant 68 : index
    %c0_23 = arith.constant 0 : index
    %37 = vector.load %arg12[%c68, %c0_23] : memref<108x256xf32, #tpu.memory_space<vmem>>, vector<8x256xf32>
    tpu.vector_store %arg12[%c68, %c0_23], %36 {strides = array<i32>} : memref<108x256xf32, #tpu.memory_space<vmem>>, vector<8x256xf32>,
    %38 = vector.extract_strided_slice %7 {offsets = [0, 129], sizes = [8, 256], strides = [1, 1]} : vector<8x512xf32> to vector<8x256xf32>
    %c5 = arith.constant 5 : index
    %c0_24 = arith.constant 0 : index
    %c0_25 = arith.constant 0 : index
    %39 = vector.load %arg7[%c5, %c0_24, %c0_25] : memref<9x1x256xf32, #tpu.memory_space<vmem>>, vector<1x1x256xf32>
    %40 = vector.shape_cast %39 : vector<1x1x256xf32> to vector<1x256xf32>
    %41 = vector.broadcast %40 : vector<1x256xf32> to vector<8x256xf32>
    %42 = arith.mulf %38, %41 : vector<8x256xf32>
    %c76 = arith.constant 76 : index
    %c0_26 = arith.constant 0 : index
    %43 = vector.load %arg12[%c76, %c0_26] : memref<108x256xf32, #tpu.memory_space<vmem>>, vector<8x256xf32>
    tpu.vector_store %arg12[%c76, %c0_26], %42 {strides = array<i32>} : memref<108x256xf32, #tpu.memory_space<vmem>>, vector<8x256xf32>,
    %44 = vector.extract_strided_slice %7 {offsets = [0, 143], sizes = [8, 256], strides = [1, 1]} : vector<8x512xf32> to vector<8x256xf32>
    %c6 = arith.constant 6 : index
    %c0_27 = arith.constant 0 : index
    %c0_28 = arith.constant 0 : index
    %45 = vector.load %arg7[%c6, %c0_27, %c0_28] : memref<9x1x256xf32, #tpu.memory_space<vmem>>, vector<1x1x256xf32>
    %46 = vector.shape_cast %45 : vector<1x1x256xf32> to vector<1x256xf32>
    %47 = vector.broadcast %46 : vector<1x256xf32> to vector<8x256xf32>
    %48 = arith.mulf %44, %47 : vector<8x256xf32>
    %c84 = arith.constant 84 : index
    %c0_29 = arith.constant 0 : index
    %49 = vector.load %arg12[%c84, %c0_29] : memref<108x256xf32, #tpu.memory_space<vmem>>, vector<8x256xf32>
    tpu.vector_store %arg12[%c84, %c0_29], %48 {strides = array<i32>} : memref<108x256xf32, #tpu.memory_space<vmem>>, vector<8x256xf32>,
    %50 = vector.extract_strided_slice %7 {offsets = [0, 144], sizes = [8, 256], strides = [1, 1]} : vector<8x512xf32> to vector<8x256xf32>
    %c7 = arith.constant 7 : index
    %c0_30 = arith.constant 0 : index
    %c0_31 = arith.constant 0 : index
    %51 = vector.load %arg7[%c7, %c0_30, %c0_31] : memref<9x1x256xf32, #tpu.memory_space<vmem>>, vector<1x1x256xf32>
    %52 = vector.shape_cast %51 : vector<1x1x256xf32> to vector<1x256xf32>
    %53 = vector.broadcast %52 : vector<1x256xf32> to vector<8x256xf32>
    %54 = arith.mulf %50, %53 : vector<8x256xf32>
    %c92 = arith.constant 92 : index
    %c0_32 = arith.constant 0 : index
    %55 = vector.load %arg12[%c92, %c0_32] : memref<108x256xf32, #tpu.memory_space<vmem>>, vector<8x256xf32>
    tpu.vector_store %arg12[%c92, %c0_32], %54 {strides = array<i32>} : memref<108x256xf32, #tpu.memory_space<vmem>>, vector<8x256xf32>,
    %56 = vector.extract_strided_slice %7 {offsets = [0, 145], sizes = [8, 256], strides = [1, 1]} : vector<8x512xf32> to vector<8x256xf32>
    %c8 = arith.constant 8 : index
    %c0_33 = arith.constant 0 : index
    %c0_34 = arith.constant 0 : index
    %57 = vector.load %arg7[%c8, %c0_33, %c0_34] : memref<9x1x256xf32, #tpu.memory_space<vmem>>, vector<1x1x256xf32>
    %58 = vector.shape_cast %57 : vector<1x1x256xf32> to vector<1x256xf32>
    %59 = vector.broadcast %58 : vector<1x256xf32> to vector<8x256xf32>
    %60 = arith.mulf %56, %59 : vector<8x256xf32>
    %c100 = arith.constant 100 : index
    %c0_35 = arith.constant 0 : index
    %61 = vector.load %arg12[%c100, %c0_35] : memref<108x256xf32, #tpu.memory_space<vmem>>, vector<8x256xf32>
    tpu.vector_store %arg12[%c100, %c0_35], %60 {strides = array<i32>} : memref<108x256xf32, #tpu.memory_space<vmem>>, vector<8x256xf32>,
    %c0_36 = arith.constant 0 : index
    %c0_37 = arith.constant 0 : index
    %62 = vector.load %arg5[%c0_36, %c0_37] : memref<32x108xbf16, #tpu.memory_space<vmem>>, vector<32x108xbf16>
    %c0_38 = arith.constant 0 : index
    %c0_39 = arith.constant 0 : index
    %63 = vector.load %arg12[%c0_38, %c0_39] : memref<108x256xf32, #tpu.memory_space<vmem>>, vector<108x256xf32>
    %64 = arith.truncf %63 : vector<108x256xf32> to vector<108x256xbf16>
    %cst = arith.constant dense<0.000000e+00> : vector<32x256xf32>
    %65 = tpu.matmul %62, %64, %cst {dimension_numbers = #tpu.dot_dimension_numbers<[1], [0], [0], [1], [0, 0, 1, 1], [], []>} : vector<32x108xbf16>, vector<108x256xbf16>, vector<32x256xf32> -> vector<32x256xf32>
    %c0_40 = arith.constant 0 : index
    %c0_41 = arith.constant 0 : index
    %66 = vector.load %arg6[%c0_40, %c0_41] : memref<32x1xf32, #tpu.memory_space<vmem>>, vector<32x1xf32>
    %67 = vector.broadcast %66 : vector<32x1xf32> to vector<32x256xf32>
    %68 = arith.addf %65, %67 : vector<32x256xf32>
    %c0_42 = arith.constant 0 : index
    %c0_43 = arith.constant 0 : index
    %69 = vector.load %arg11[%c0_42, %c0_43] : memref<8x256xf32, #tpu.memory_space<vmem>>, vector<8x256xf32>
    %70 = vector.extract_strided_slice %68 {offsets = [0, 0], sizes = [8, 256], strides = [1, 1]} : vector<32x256xf32> to vector<8x256xf32>
    %71 = vector.extract_strided_slice %68 {offsets = [8, 0], sizes = [8, 256], strides = [1, 1]} : vector<32x256xf32> to vector<8x256xf32>
    %72 = vector.extract_strided_slice %68 {offsets = [16, 0], sizes = [8, 256], strides = [1, 1]} : vector<32x256xf32> to vector<8x256xf32>
    %73 = vector.extract_strided_slice %68 {offsets = [24, 0], sizes = [8, 256], strides = [1, 1]} : vector<32x256xf32> to vector<8x256xf32>
    %74 = arith.negf %70 : vector<8x256xf32>
    %75 = math.exp %74 : vector<8x256xf32>
    %cst_44 = arith.constant 1.000000e+00 : f32
    %76 = vector.broadcast %cst_44 : f32 to vector<8x256xf32>
    %77 = arith.addf %76, %75 : vector<8x256xf32>
    %78 = arith.divf %76, %77 : vector<8x256xf32>
    %79 = arith.negf %71 : vector<8x256xf32>
    %80 = math.exp %79 : vector<8x256xf32>
    %cst_45 = arith.constant 1.000000e+00 : f32
    %81 = vector.broadcast %cst_45 : f32 to vector<8x256xf32>
    %82 = arith.addf %81, %80 : vector<8x256xf32>
    %83 = arith.divf %81, %82 : vector<8x256xf32>
    %84 = arith.mulf %83, %69 : vector<8x256xf32>
    %85 = math.tanh %72 : vector<8x256xf32>
    %86 = arith.mulf %78, %85 : vector<8x256xf32>
    %87 = arith.addf %84, %86 : vector<8x256xf32>
    %88 = arith.negf %73 : vector<8x256xf32>
    %89 = math.exp %88 : vector<8x256xf32>
    %cst_46 = arith.constant 1.000000e+00 : f32
    %90 = vector.broadcast %cst_46 : f32 to vector<8x256xf32>
    %91 = arith.addf %90, %89 : vector<8x256xf32>
    %92 = arith.divf %90, %91 : vector<8x256xf32>
    %93 = math.tanh %87 : vector<8x256xf32>
    %94 = arith.mulf %92, %93 : vector<8x256xf32>
    %c0_47 = arith.constant 0 : index
    %c0_48 = arith.constant 0 : index
    %95 = vector.load %arg11[%c0_47, %c0_48] : memref<8x256xf32, #tpu.memory_space<vmem>>, vector<8x256xf32>
    tpu.vector_store %arg11[%c0_47, %c0_48], %87 {strides = array<i32>} : memref<8x256xf32, #tpu.memory_space<vmem>>, vector<8x256xf32>,
    %c0_49 = arith.constant 0 : index
    %c128 = arith.constant 128 : index
    %96 = vector.load %arg10[%c0_49, %c128] : memref<8x512xf32, #tpu.memory_space<vmem>>, vector<8x256xf32>
    tpu.vector_store %arg10[%c0_49, %c128], %94 {strides = array<i32>} : memref<8x512xf32, #tpu.memory_space<vmem>>, vector<8x256xf32>,
    %c0_50 = arith.constant 0 : index
    %c0_51 = arith.constant 0 : index
    %c0_52 = arith.constant 0 : index
    %c0_53 = arith.constant 0 : index
    %97 = vector.load %arg8[%c0_50, %c0_51, %c0_52, %c0_53] : memref<1x1x8x256xf32, #tpu.memory_space<vmem>>, vector<1x1x8x256xf32>
    %98 = vector.shape_cast %97 : vector<1x1x8x256xf32> to vector<8x256xf32>
    %99 = vector.shape_cast %94 : vector<8x256xf32> to vector<1x1x8x256xf32>
    tpu.vector_store %arg8[%c0_50, %c0_51, %c0_52, %c0_53], %99 {strides = array<i32>} : memref<1x1x8x256xf32, #tpu.memory_space<vmem>>, vector<1x1x8x256xf32>,
    %c0_54 = arith.constant 0 : index
    %c0_55 = arith.constant 0 : index
    %c0_56 = arith.constant 0 : index
    %100 = vector.load %arg9[%c0_54, %c0_55, %c0_56] : memref<1x8x256xf32, #tpu.memory_space<vmem>>, vector<1x8x256xf32>
    %101 = vector.shape_cast %100 : vector<1x8x256xf32> to vector<8x256xf32>
    %102 = vector.shape_cast %87 : vector<8x256xf32> to vector<1x8x256xf32>
    tpu.vector_store %arg9[%c0_54, %c0_55, %c0_56], %102 {strides = array<i32>} : memref<1x8x256xf32, #tpu.memory_space<vmem>>, vector<1x8x256xf32>,
    return
  }
  func.func @transform_0(%arg0: i32, %arg1: i32) -> (i32, i32, i32, i32) {
    %c0_i32 = arith.constant 0 : i32
    %c0_i32_0 = arith.constant 0 : i32
    %c0_i32_1 = arith.constant 0 : i32
    return %arg1, %arg0, %c0_i32, %c0_i32_0 : i32, i32, i32, i32
  }
  func.func @transform_1(%arg0: i32, %arg1: i32) -> (i32, i32, i32) {
    %c0_i32 = arith.constant 0 : i32
    %c0_i32_0 = arith.constant 0 : i32
    %c0_i32_1 = arith.constant 0 : i32
    return %arg0, %c0_i32, %c0_i32_0 : i32, i32, i32
  }
  func.func @transform_2(%arg0: i32, %arg1: i32) -> (i32, i32, i32) {
    %c0_i32 = arith.constant 0 : i32
    %c0_i32_0 = arith.constant 0 : i32
    %c0_i32_1 = arith.constant 0 : i32
    return %arg0, %c0_i32, %c0_i32_0 : i32, i32, i32
  }
  func.func @transform_3(%arg0: i32, %arg1: i32) -> (i32, i32) {
    %c0_i32 = arith.constant 0 : i32
    %c0_i32_0 = arith.constant 0 : i32
    %c0_i32_1 = arith.constant 0 : i32
    return %c0_i32, %c0_i32_0 : i32, i32
  }
  func.func @transform_4(%arg0: i32, %arg1: i32) -> (i32, i32) {
    %c0_i32 = arith.constant 0 : i32
    %c0_i32_0 = arith.constant 0 : i32
    %c0_i32_1 = arith.constant 0 : i32
    return %c0_i32, %c0_i32_0 : i32, i32
  }
  func.func @transform_5(%arg0: i32, %arg1: i32) -> (i32, i32, i32) {
    %c0_i32 = arith.constant 0 : i32
    %c0_i32_0 = arith.constant 0 : i32
    %c0_i32_1 = arith.constant 0 : i32
    %c0_i32_2 = arith.constant 0 : i32
    return %c0_i32, %c0_i32_0, %c0_i32_1 : i32, i32, i32
  }
  func.func @transform_6(%arg0: i32, %arg1: i32) -> (i32, i32, i32, i32) {
    %c0_i32 = arith.constant 0 : i32
    %c0_i32_0 = arith.constant 0 : i32
    %c0_i32_1 = arith.constant 0 : i32
    return %arg1, %arg0, %c0_i32, %c0_i32_0 : i32, i32, i32, i32
  }
  func.func @transform_7(%arg0: i32, %arg1: i32) -> (i32, i32, i32) {
    %c0_i32 = arith.constant 0 : i32
    %c0_i32_0 = arith.constant 0 : i32
    %c0_i32_1 = arith.constant 0 : i32
    return %arg0, %c0_i32, %c0_i32_0 : i32, i32, i32
  }
}

module attributes {stable_mosaic.version = 11 : i64} {
  func.func @kernel(%arg0: i32, %arg1: i32, %arg2: memref<1x1x72x256xbf16, #tpu.memory_space<vmem>>, %arg3: memref<1x16x256xf32, #tpu.memory_space<vmem>>, %arg4: memref<1x16x256xf32, #tpu.memory_space<vmem>>, %arg5: memref<64x216xbf16, #tpu.memory_space<vmem>>, %arg6: memref<64x1xf32, #tpu.memory_space<vmem>>, %arg7: memref<9x1x256xf32, #tpu.memory_space<vmem>>, %arg8: memref<1x1x16x256xf32, #tpu.memory_space<vmem>>, %arg9: memref<1x16x256xf32, #tpu.memory_space<vmem>>, %arg10: memref<16x512xf32, #tpu.memory_space<vmem>>, %arg11: memref<16x256xf32, #tpu.memory_space<vmem>>, %arg12: memref<216x256xf32, #tpu.memory_space<vmem>>) attributes {dimension_semantics = [#tpu.dimension_semantics<parallel>, #tpu.dimension_semantics<arbitrary>], iteration_bounds = array<i64: 2, 8>, scalar_prefetch = 0 : i64, scratch_operands = 3 : i64, tpu.core_type = #tpu.core_type<tc>, window_params = [{transform_indices = @transform_0, window_bounds = array<i64: 1, 1, 72, 256>}, {transform_indices = @transform_1, window_bounds = array<i64: 1, 16, 256>}, {transform_indices = @transform_2, window_bounds = array<i64: 1, 16, 256>}, {pipeline_mode = #tpu.pipeline_mode<synchronous>, transform_indices = @transform_3, window_bounds = array<i64: 64, 216>}, {pipeline_mode = #tpu.pipeline_mode<synchronous>, transform_indices = @transform_4, window_bounds = array<i64: 64, 1>}, {pipeline_mode = #tpu.pipeline_mode<synchronous>, transform_indices = @transform_5, window_bounds = array<i64: 9, 1, 256>}, {transform_indices = @transform_6, window_bounds = array<i64: 1, 1, 16, 256>}, {transform_indices = @transform_7, window_bounds = array<i64: 1, 16, 256>}]} {
    %c0_i32 = arith.constant 0 : i32
    %0 = arith.cmpi eq, %arg1, %c0_i32 : i32
    %1 = arith.extui %0 : i1 to i32
    %c0_i32_0 = arith.constant 0 : i32
    %2 = arith.cmpi ne, %1, %c0_i32_0 : i32
    scf.if %2 {
      %cst_57 = arith.constant 0.000000e+00 : f32
      %103 = vector.broadcast %cst_57 : f32 to vector<16x512xf32>
      %c0_58 = arith.constant 0 : index
      %c0_59 = arith.constant 0 : index
      %104 = vector.load %arg10[%c0_58, %c0_59] : memref<16x512xf32, #tpu.memory_space<vmem>>, vector<16x512xf32>
      tpu.vector_store %arg10[%c0_58, %c0_59], %103 {strides = array<i32>} : memref<16x512xf32, #tpu.memory_space<vmem>>, vector<16x512xf32>,
      %c0_60 = arith.constant 0 : index
      %c0_61 = arith.constant 0 : index
      %c0_62 = arith.constant 0 : index
      %105 = vector.load %arg3[%c0_60, %c0_61, %c0_62] : memref<1x16x256xf32, #tpu.memory_space<vmem>>, vector<1x16x256xf32>
      %106 = vector.shape_cast %105 : vector<1x16x256xf32> to vector<16x256xf32>
      %c0_63 = arith.constant 0 : index
      %c128_64 = arith.constant 128 : index
      %107 = vector.load %arg10[%c0_63, %c128_64] : memref<16x512xf32, #tpu.memory_space<vmem>>, vector<16x256xf32>
      tpu.vector_store %arg10[%c0_63, %c128_64], %106 {strides = array<i32>} : memref<16x512xf32, #tpu.memory_space<vmem>>, vector<16x256xf32>,
      %c0_65 = arith.constant 0 : index
      %c0_66 = arith.constant 0 : index
      %c0_67 = arith.constant 0 : index
      %108 = vector.load %arg4[%c0_65, %c0_66, %c0_67] : memref<1x16x256xf32, #tpu.memory_space<vmem>>, vector<1x16x256xf32>
      %109 = vector.shape_cast %108 : vector<1x16x256xf32> to vector<16x256xf32>
      %c0_68 = arith.constant 0 : index
      %c0_69 = arith.constant 0 : index
      %110 = vector.load %arg11[%c0_68, %c0_69] : memref<16x256xf32, #tpu.memory_space<vmem>>, vector<16x256xf32>
      tpu.vector_store %arg11[%c0_68, %c0_69], %109 {strides = array<i32>} : memref<16x256xf32, #tpu.memory_space<vmem>>, vector<16x256xf32>,
    } else {
    }
    %c0 = arith.constant 0 : index
    %c0_1 = arith.constant 0 : index
    %c0_2 = arith.constant 0 : index
    %c0_3 = arith.constant 0 : index
    %3 = vector.load %arg2[%c0, %c0_1, %c0_2, %c0_3] : memref<1x1x72x256xbf16, #tpu.memory_space<vmem>>, vector<1x1x72x256xbf16>
    %4 = vector.shape_cast %3 : vector<1x1x72x256xbf16> to vector<72x256xbf16>
    %5 = arith.extf %4 : vector<72x256xbf16> to vector<72x256xf32>
    %c0_4 = arith.constant 0 : index
    %c0_5 = arith.constant 0 : index
    %6 = vector.load %arg12[%c0_4, %c0_5] : memref<216x256xf32, #tpu.memory_space<vmem>>, vector<72x256xf32>
    tpu.vector_store %arg12[%c0_4, %c0_5], %5 {strides = array<i32>} : memref<216x256xf32, #tpu.memory_space<vmem>>, vector<72x256xf32>,
    %c0_6 = arith.constant 0 : index
    %c0_7 = arith.constant 0 : index
    %7 = vector.load %arg10[%c0_6, %c0_7] : memref<16x512xf32, #tpu.memory_space<vmem>>, vector<16x512xf32>
    %8 = vector.extract_strided_slice %7 {offsets = [0, 111], sizes = [16, 256], strides = [1, 1]} : vector<16x512xf32> to vector<16x256xf32>
    %c0_8 = arith.constant 0 : index
    %c0_9 = arith.constant 0 : index
    %c0_10 = arith.constant 0 : index
    %9 = vector.load %arg7[%c0_8, %c0_9, %c0_10] : memref<9x1x256xf32, #tpu.memory_space<vmem>>, vector<1x1x256xf32>
    %10 = vector.shape_cast %9 : vector<1x1x256xf32> to vector<1x256xf32>
    %11 = vector.broadcast %10 : vector<1x256xf32> to vector<16x256xf32>
    %12 = arith.mulf %8, %11 : vector<16x256xf32>
    %c72 = arith.constant 72 : index
    %c0_11 = arith.constant 0 : index
    %13 = vector.load %arg12[%c72, %c0_11] : memref<216x256xf32, #tpu.memory_space<vmem>>, vector<16x256xf32>
    tpu.vector_store %arg12[%c72, %c0_11], %12 {strides = array<i32>} : memref<216x256xf32, #tpu.memory_space<vmem>>, vector<16x256xf32>,
    %14 = vector.extract_strided_slice %7 {offsets = [0, 112], sizes = [16, 256], strides = [1, 1]} : vector<16x512xf32> to vector<16x256xf32>
    %c1 = arith.constant 1 : index
    %c0_12 = arith.constant 0 : index
    %c0_13 = arith.constant 0 : index
    %15 = vector.load %arg7[%c1, %c0_12, %c0_13] : memref<9x1x256xf32, #tpu.memory_space<vmem>>, vector<1x1x256xf32>
    %16 = vector.shape_cast %15 : vector<1x1x256xf32> to vector<1x256xf32>
    %17 = vector.broadcast %16 : vector<1x256xf32> to vector<16x256xf32>
    %18 = arith.mulf %14, %17 : vector<16x256xf32>
    %c88 = arith.constant 88 : index
    %c0_14 = arith.constant 0 : index
    %19 = vector.load %arg12[%c88, %c0_14] : memref<216x256xf32, #tpu.memory_space<vmem>>, vector<16x256xf32>
    tpu.vector_store %arg12[%c88, %c0_14], %18 {strides = array<i32>} : memref<216x256xf32, #tpu.memory_space<vmem>>, vector<16x256xf32>,
    %20 = vector.extract_strided_slice %7 {offsets = [0, 113], sizes = [16, 256], strides = [1, 1]} : vector<16x512xf32> to vector<16x256xf32>
    %c2 = arith.constant 2 : index
    %c0_15 = arith.constant 0 : index
    %c0_16 = arith.constant 0 : index
    %21 = vector.load %arg7[%c2, %c0_15, %c0_16] : memref<9x1x256xf32, #tpu.memory_space<vmem>>, vector<1x1x256xf32>
    %22 = vector.shape_cast %21 : vector<1x1x256xf32> to vector<1x256xf32>
    %23 = vector.broadcast %22 : vector<1x256xf32> to vector<16x256xf32>
    %24 = arith.mulf %20, %23 : vector<16x256xf32>
    %c104 = arith.constant 104 : index
    %c0_17 = arith.constant 0 : index
    %25 = vector.load %arg12[%c104, %c0_17] : memref<216x256xf32, #tpu.memory_space<vmem>>, vector<16x256xf32>
    tpu.vector_store %arg12[%c104, %c0_17], %24 {strides = array<i32>} : memref<216x256xf32, #tpu.memory_space<vmem>>, vector<16x256xf32>,
    %26 = vector.extract_strided_slice %7 {offsets = [0, 127], sizes = [16, 256], strides = [1, 1]} : vector<16x512xf32> to vector<16x256xf32>
    %c3 = arith.constant 3 : index
    %c0_18 = arith.constant 0 : index
    %c0_19 = arith.constant 0 : index
    %27 = vector.load %arg7[%c3, %c0_18, %c0_19] : memref<9x1x256xf32, #tpu.memory_space<vmem>>, vector<1x1x256xf32>
    %28 = vector.shape_cast %27 : vector<1x1x256xf32> to vector<1x256xf32>
    %29 = vector.broadcast %28 : vector<1x256xf32> to vector<16x256xf32>
    %30 = arith.mulf %26, %29 : vector<16x256xf32>
    %c120 = arith.constant 120 : index
    %c0_20 = arith.constant 0 : index
    %31 = vector.load %arg12[%c120, %c0_20] : memref<216x256xf32, #tpu.memory_space<vmem>>, vector<16x256xf32>
    tpu.vector_store %arg12[%c120, %c0_20], %30 {strides = array<i32>} : memref<216x256xf32, #tpu.memory_space<vmem>>, vector<16x256xf32>,
    %32 = vector.extract_strided_slice %7 {offsets = [0, 128], sizes = [16, 256], strides = [1, 1]} : vector<16x512xf32> to vector<16x256xf32>
    %c4 = arith.constant 4 : index
    %c0_21 = arith.constant 0 : index
    %c0_22 = arith.constant 0 : index
    %33 = vector.load %arg7[%c4, %c0_21, %c0_22] : memref<9x1x256xf32, #tpu.memory_space<vmem>>, vector<1x1x256xf32>
    %34 = vector.shape_cast %33 : vector<1x1x256xf32> to vector<1x256xf32>
    %35 = vector.broadcast %34 : vector<1x256xf32> to vector<16x256xf32>
    %36 = arith.mulf %32, %35 : vector<16x256xf32>
    %c136 = arith.constant 136 : index
    %c0_23 = arith.constant 0 : index
    %37 = vector.load %arg12[%c136, %c0_23] : memref<216x256xf32, #tpu.memory_space<vmem>>, vector<16x256xf32>
    tpu.vector_store %arg12[%c136, %c0_23], %36 {strides = array<i32>} : memref<216x256xf32, #tpu.memory_space<vmem>>, vector<16x256xf32>,
    %38 = vector.extract_strided_slice %7 {offsets = [0, 129], sizes = [16, 256], strides = [1, 1]} : vector<16x512xf32> to vector<16x256xf32>
    %c5 = arith.constant 5 : index
    %c0_24 = arith.constant 0 : index
    %c0_25 = arith.constant 0 : index
    %39 = vector.load %arg7[%c5, %c0_24, %c0_25] : memref<9x1x256xf32, #tpu.memory_space<vmem>>, vector<1x1x256xf32>
    %40 = vector.shape_cast %39 : vector<1x1x256xf32> to vector<1x256xf32>
    %41 = vector.broadcast %40 : vector<1x256xf32> to vector<16x256xf32>
    %42 = arith.mulf %38, %41 : vector<16x256xf32>
    %c152 = arith.constant 152 : index
    %c0_26 = arith.constant 0 : index
    %43 = vector.load %arg12[%c152, %c0_26] : memref<216x256xf32, #tpu.memory_space<vmem>>, vector<16x256xf32>
    tpu.vector_store %arg12[%c152, %c0_26], %42 {strides = array<i32>} : memref<216x256xf32, #tpu.memory_space<vmem>>, vector<16x256xf32>,
    %44 = vector.extract_strided_slice %7 {offsets = [0, 143], sizes = [16, 256], strides = [1, 1]} : vector<16x512xf32> to vector<16x256xf32>
    %c6 = arith.constant 6 : index
    %c0_27 = arith.constant 0 : index
    %c0_28 = arith.constant 0 : index
    %45 = vector.load %arg7[%c6, %c0_27, %c0_28] : memref<9x1x256xf32, #tpu.memory_space<vmem>>, vector<1x1x256xf32>
    %46 = vector.shape_cast %45 : vector<1x1x256xf32> to vector<1x256xf32>
    %47 = vector.broadcast %46 : vector<1x256xf32> to vector<16x256xf32>
    %48 = arith.mulf %44, %47 : vector<16x256xf32>
    %c168 = arith.constant 168 : index
    %c0_29 = arith.constant 0 : index
    %49 = vector.load %arg12[%c168, %c0_29] : memref<216x256xf32, #tpu.memory_space<vmem>>, vector<16x256xf32>
    tpu.vector_store %arg12[%c168, %c0_29], %48 {strides = array<i32>} : memref<216x256xf32, #tpu.memory_space<vmem>>, vector<16x256xf32>,
    %50 = vector.extract_strided_slice %7 {offsets = [0, 144], sizes = [16, 256], strides = [1, 1]} : vector<16x512xf32> to vector<16x256xf32>
    %c7 = arith.constant 7 : index
    %c0_30 = arith.constant 0 : index
    %c0_31 = arith.constant 0 : index
    %51 = vector.load %arg7[%c7, %c0_30, %c0_31] : memref<9x1x256xf32, #tpu.memory_space<vmem>>, vector<1x1x256xf32>
    %52 = vector.shape_cast %51 : vector<1x1x256xf32> to vector<1x256xf32>
    %53 = vector.broadcast %52 : vector<1x256xf32> to vector<16x256xf32>
    %54 = arith.mulf %50, %53 : vector<16x256xf32>
    %c184 = arith.constant 184 : index
    %c0_32 = arith.constant 0 : index
    %55 = vector.load %arg12[%c184, %c0_32] : memref<216x256xf32, #tpu.memory_space<vmem>>, vector<16x256xf32>
    tpu.vector_store %arg12[%c184, %c0_32], %54 {strides = array<i32>} : memref<216x256xf32, #tpu.memory_space<vmem>>, vector<16x256xf32>,
    %56 = vector.extract_strided_slice %7 {offsets = [0, 145], sizes = [16, 256], strides = [1, 1]} : vector<16x512xf32> to vector<16x256xf32>
    %c8 = arith.constant 8 : index
    %c0_33 = arith.constant 0 : index
    %c0_34 = arith.constant 0 : index
    %57 = vector.load %arg7[%c8, %c0_33, %c0_34] : memref<9x1x256xf32, #tpu.memory_space<vmem>>, vector<1x1x256xf32>
    %58 = vector.shape_cast %57 : vector<1x1x256xf32> to vector<1x256xf32>
    %59 = vector.broadcast %58 : vector<1x256xf32> to vector<16x256xf32>
    %60 = arith.mulf %56, %59 : vector<16x256xf32>
    %c200 = arith.constant 200 : index
    %c0_35 = arith.constant 0 : index
    %61 = vector.load %arg12[%c200, %c0_35] : memref<216x256xf32, #tpu.memory_space<vmem>>, vector<16x256xf32>
    tpu.vector_store %arg12[%c200, %c0_35], %60 {strides = array<i32>} : memref<216x256xf32, #tpu.memory_space<vmem>>, vector<16x256xf32>,
    %c0_36 = arith.constant 0 : index
    %c0_37 = arith.constant 0 : index
    %62 = vector.load %arg5[%c0_36, %c0_37] : memref<64x216xbf16, #tpu.memory_space<vmem>>, vector<64x216xbf16>
    %c0_38 = arith.constant 0 : index
    %c0_39 = arith.constant 0 : index
    %63 = vector.load %arg12[%c0_38, %c0_39] : memref<216x256xf32, #tpu.memory_space<vmem>>, vector<216x256xf32>
    %64 = arith.truncf %63 : vector<216x256xf32> to vector<216x256xbf16>
    %cst = arith.constant dense<0.000000e+00> : vector<64x256xf32>
    %65 = tpu.matmul %62, %64, %cst {dimension_numbers = #tpu.dot_dimension_numbers<[1], [0], [0], [1], [0, 0, 1, 1], [], []>} : vector<64x216xbf16>, vector<216x256xbf16>, vector<64x256xf32> -> vector<64x256xf32>
    %c0_40 = arith.constant 0 : index
    %c0_41 = arith.constant 0 : index
    %66 = vector.load %arg6[%c0_40, %c0_41] : memref<64x1xf32, #tpu.memory_space<vmem>>, vector<64x1xf32>
    %67 = vector.broadcast %66 : vector<64x1xf32> to vector<64x256xf32>
    %68 = arith.addf %65, %67 : vector<64x256xf32>
    %c0_42 = arith.constant 0 : index
    %c0_43 = arith.constant 0 : index
    %69 = vector.load %arg11[%c0_42, %c0_43] : memref<16x256xf32, #tpu.memory_space<vmem>>, vector<16x256xf32>
    %70 = vector.extract_strided_slice %68 {offsets = [0, 0], sizes = [16, 256], strides = [1, 1]} : vector<64x256xf32> to vector<16x256xf32>
    %71 = vector.extract_strided_slice %68 {offsets = [16, 0], sizes = [16, 256], strides = [1, 1]} : vector<64x256xf32> to vector<16x256xf32>
    %72 = vector.extract_strided_slice %68 {offsets = [32, 0], sizes = [16, 256], strides = [1, 1]} : vector<64x256xf32> to vector<16x256xf32>
    %73 = vector.extract_strided_slice %68 {offsets = [48, 0], sizes = [16, 256], strides = [1, 1]} : vector<64x256xf32> to vector<16x256xf32>
    %74 = arith.negf %70 : vector<16x256xf32>
    %75 = math.exp %74 : vector<16x256xf32>
    %cst_44 = arith.constant 1.000000e+00 : f32
    %76 = vector.broadcast %cst_44 : f32 to vector<16x256xf32>
    %77 = arith.addf %76, %75 : vector<16x256xf32>
    %78 = arith.divf %76, %77 : vector<16x256xf32>
    %79 = arith.negf %71 : vector<16x256xf32>
    %80 = math.exp %79 : vector<16x256xf32>
    %cst_45 = arith.constant 1.000000e+00 : f32
    %81 = vector.broadcast %cst_45 : f32 to vector<16x256xf32>
    %82 = arith.addf %81, %80 : vector<16x256xf32>
    %83 = arith.divf %81, %82 : vector<16x256xf32>
    %84 = arith.mulf %83, %69 : vector<16x256xf32>
    %85 = math.tanh %72 : vector<16x256xf32>
    %86 = arith.mulf %78, %85 : vector<16x256xf32>
    %87 = arith.addf %84, %86 : vector<16x256xf32>
    %88 = arith.negf %73 : vector<16x256xf32>
    %89 = math.exp %88 : vector<16x256xf32>
    %cst_46 = arith.constant 1.000000e+00 : f32
    %90 = vector.broadcast %cst_46 : f32 to vector<16x256xf32>
    %91 = arith.addf %90, %89 : vector<16x256xf32>
    %92 = arith.divf %90, %91 : vector<16x256xf32>
    %93 = math.tanh %87 : vector<16x256xf32>
    %94 = arith.mulf %92, %93 : vector<16x256xf32>
    %c0_47 = arith.constant 0 : index
    %c0_48 = arith.constant 0 : index
    %95 = vector.load %arg11[%c0_47, %c0_48] : memref<16x256xf32, #tpu.memory_space<vmem>>, vector<16x256xf32>
    tpu.vector_store %arg11[%c0_47, %c0_48], %87 {strides = array<i32>} : memref<16x256xf32, #tpu.memory_space<vmem>>, vector<16x256xf32>,
    %c0_49 = arith.constant 0 : index
    %c128 = arith.constant 128 : index
    %96 = vector.load %arg10[%c0_49, %c128] : memref<16x512xf32, #tpu.memory_space<vmem>>, vector<16x256xf32>
    tpu.vector_store %arg10[%c0_49, %c128], %94 {strides = array<i32>} : memref<16x512xf32, #tpu.memory_space<vmem>>, vector<16x256xf32>,
    %c0_50 = arith.constant 0 : index
    %c0_51 = arith.constant 0 : index
    %c0_52 = arith.constant 0 : index
    %c0_53 = arith.constant 0 : index
    %97 = vector.load %arg8[%c0_50, %c0_51, %c0_52, %c0_53] : memref<1x1x16x256xf32, #tpu.memory_space<vmem>>, vector<1x1x16x256xf32>
    %98 = vector.shape_cast %97 : vector<1x1x16x256xf32> to vector<16x256xf32>
    %99 = vector.shape_cast %94 : vector<16x256xf32> to vector<1x1x16x256xf32>
    tpu.vector_store %arg8[%c0_50, %c0_51, %c0_52, %c0_53], %99 {strides = array<i32>} : memref<1x1x16x256xf32, #tpu.memory_space<vmem>>, vector<1x1x16x256xf32>,
    %c0_54 = arith.constant 0 : index
    %c0_55 = arith.constant 0 : index
    %c0_56 = arith.constant 0 : index
    %100 = vector.load %arg9[%c0_54, %c0_55, %c0_56] : memref<1x16x256xf32, #tpu.memory_space<vmem>>, vector<1x16x256xf32>
    %101 = vector.shape_cast %100 : vector<1x16x256xf32> to vector<16x256xf32>
    %102 = vector.shape_cast %87 : vector<16x256xf32> to vector<1x16x256xf32>
    tpu.vector_store %arg9[%c0_54, %c0_55, %c0_56], %102 {strides = array<i32>} : memref<1x16x256xf32, #tpu.memory_space<vmem>>, vector<1x16x256xf32>,
    return
  }
  func.func @transform_0(%arg0: i32, %arg1: i32) -> (i32, i32, i32, i32) {
    %c0_i32 = arith.constant 0 : i32
    %c0_i32_0 = arith.constant 0 : i32
    %c0_i32_1 = arith.constant 0 : i32
    return %arg1, %arg0, %c0_i32, %c0_i32_0 : i32, i32, i32, i32
  }
  func.func @transform_1(%arg0: i32, %arg1: i32) -> (i32, i32, i32) {
    %c0_i32 = arith.constant 0 : i32
    %c0_i32_0 = arith.constant 0 : i32
    %c0_i32_1 = arith.constant 0 : i32
    return %arg0, %c0_i32, %c0_i32_0 : i32, i32, i32
  }
  func.func @transform_2(%arg0: i32, %arg1: i32) -> (i32, i32, i32) {
    %c0_i32 = arith.constant 0 : i32
    %c0_i32_0 = arith.constant 0 : i32
    %c0_i32_1 = arith.constant 0 : i32
    return %arg0, %c0_i32, %c0_i32_0 : i32, i32, i32
  }
  func.func @transform_3(%arg0: i32, %arg1: i32) -> (i32, i32) {
    %c0_i32 = arith.constant 0 : i32
    %c0_i32_0 = arith.constant 0 : i32
    %c0_i32_1 = arith.constant 0 : i32
    return %c0_i32, %c0_i32_0 : i32, i32
  }
  func.func @transform_4(%arg0: i32, %arg1: i32) -> (i32, i32) {
    %c0_i32 = arith.constant 0 : i32
    %c0_i32_0 = arith.constant 0 : i32
    %c0_i32_1 = arith.constant 0 : i32
    return %c0_i32, %c0_i32_0 : i32, i32
  }
  func.func @transform_5(%arg0: i32, %arg1: i32) -> (i32, i32, i32) {
    %c0_i32 = arith.constant 0 : i32
    %c0_i32_0 = arith.constant 0 : i32
    %c0_i32_1 = arith.constant 0 : i32
    %c0_i32_2 = arith.constant 0 : i32
    return %c0_i32, %c0_i32_0, %c0_i32_1 : i32, i32, i32
  }
  func.func @transform_6(%arg0: i32, %arg1: i32) -> (i32, i32, i32, i32) {
    %c0_i32 = arith.constant 0 : i32
    %c0_i32_0 = arith.constant 0 : i32
    %c0_i32_1 = arith.constant 0 : i32
    return %arg1, %arg0, %c0_i32, %c0_i32_0 : i32, i32, i32, i32
  }
  func.func @transform_7(%arg0: i32, %arg1: i32) -> (i32, i32, i32) {
    %c0_i32 = arith.constant 0 : i32
    %c0_i32_0 = arith.constant 0 : i32
    %c0_i32_1 = arith.constant 0 : i32
    return %arg0, %c0_i32, %c0_i32_0 : i32, i32, i32
  }
}

</mosaic_0001>

<llo_original>
// kernel: convlstm_forward_sequence.2
$region0: #{convlstm_forward_sequence.2}
  #allocation0 [shape = 'u32[]', space=smem, size = 0x4, offset = 0x4, fixed_abs, tag = 'smem constant byte address 0x4 - core index']
  #allocation1 [shape = 'u32[144,128]{1,0:T(1,128)}', space=vmem, size = 0x12000, scoped, tag = 'internal scratch']
  #allocation2 [shape = 'f32[8,512]{1,0:T(8,128)}', space=vmem, size = 0x4000, scoped, tag = 'scratch operand']
  #allocation3 [shape = 'f32[8,256]{1,0:T(8,128)}', space=vmem, size = 0x2000, scoped, tag = 'scratch operand']
  #allocation4 [shape = 'f32[108,256]{1,0:T(8,128)}', space=vmem, size = 0x1c000, scoped, tag = 'scratch operand']
  %s0 = inlined_call_operand.vmem [shape: bf16[8,2,36,256], index: 0, kind: input, shape index: {}]
  %s1 = inlined_call_operand.vmem [shape: f32[2,8,256], index: 1, kind: input, shape index: {}]
  %s2 = inlined_call_operand.vmem [shape: f32[2,8,256], index: 2, kind: input, shape index: {}]
  %s3 = inlined_call_operand.vmem [shape: bf16[32,108], index: 3, kind: input, shape index: {}]
  %s4 = inlined_call_operand.vmem [shape: f32[32,1], index: 4, kind: input, shape index: {}]
  %s5 = inlined_call_operand.vmem [shape: f32[9,1,256], index: 5, kind: input, shape index: {}]
  %s6 = inlined_call_operand.vmem [shape: f32[8,2,8,256], index: 6, kind: output, shape index: {0}]
  %s7 = inlined_call_operand.hbm [shape: f32[2,8,256], index: 7, kind: output, shape index: {1}]
  %8 = xla_tuple %s6, %s7
  %s9 = sld [smem:[#allocation0]]
  $region69: #{convlstm_forward_sequence.2} parent=0
    _
  %s11 = ssub.s32 1, %s9
  %s12 = scalar_select 0, %s11, %s9
  $region1: #{convlstm_forward_sequence.2} parent=0
    #allocation5 [shape = 'u8[16384]{0}', space=vmem, size = 0x4000, scoped, tag = 'output window, operand 1']
    #allocation6 [shape = 's32[2]{0}', space=sflag, size = 0x8, scoped, tag = 'scoped memory for convlstm_forward_sequence.2']
    %13 = vsyncpa [#allocation6], 0
    %s14 = scalar_lea.sflag [#allocation6], 1
    %15 = vsyncpa %s14, 0
    loop: start=0, step=1, limit=18
    $region2: #{convlstm_forward_sequence.2} parent=1 // loop_pre_header
      _
    $region3: #{convlstm_forward_sequence.2} parent=1 // loop_header
      %s17 = sphi 0, %s21
      %p18 = scmp.ge.s32.totalorder %s17, 18
      %s24 = sphi 0, %s36
      %s25 = sphi 0, %s32
      %s26 = sphi 0, %s24
      %s27 = sphi 0, %s25
      %s28 = sphi 0, %s26
      %s29 = sphi 0, %s27
      %s41 = sphi 0, %s43
      %s44 = sphi 0, %s41
      %s45 = sphi 0, %s44
      %s61 = sphi 0, %s45
      %s67 = sphi 0, %s69
      %s70 = sphi 0, %s67
      %s71 = sphi 0, %s70
      %s87 = sphi 0, %s71
      %s93 = sphi 0, %s95
      %s96 = sphi 0, %s93
      %s97 = sphi 0, %s96
      %s113 = sphi 0, %s97
      %s117 = sphi 0, %s117
      %s119 = sphi 0, %s117
      %s120 = sphi 0, %s119
      %s134 = sphi 0, %s120
      %s138 = sphi 0, %s138
      %s140 = sphi 0, %s138
      %s141 = sphi 0, %s140
      %s155 = sphi 0, %s141
      %s159 = sphi 0, %s159
      %s161 = sphi 0, %s159
      %s162 = sphi 0, %s161
      %s176 = sphi 0, %s162
      %s184 = sphi 0, %s186
      %s187 = sphi 0, %s184
      %s188 = sphi 0, %s187
      %s204 = sphi 0, %s188
      %s210 = sphi 0, %s212
      %s213 = sphi 0, %s210
      %s214 = sphi 0, %s213
      %s230 = sphi 0, %s214
    $region4: #{convlstm_forward_sequence.2} parent=1 // loop_header_branch
      %20 = sbr.rel (%p18) target = $region8
    $region5: #{convlstm_forward_sequence.2} parent=1 // loop_body
      %s22 = ssub.s32 %s17, 1
      %s23 = ssub.s32 %s17, 2
      %s30 = sadd.s32 1, %s25
      %p31 = scmp.ge.s32.totalorder %s30, 8
      %s32 = scalar_select %p31, 0, %s30
      %s33 = sadd.s32 1, %s24
      %s34 = scalar_select %p31, %s33, %s24
      %p35 = scmp.ge.s32.totalorder %s34, 2
      %s36 = scalar_select %p35, 0, %s34
      %s37 = ssub.s32 %s25, %s32
      %s38 = ssub.s32 %s24, %s36
      %s39 = sor.u32 %s37, %s38
      %p40 = scmp.eq.s32.totalorder %s39, 0
      %s42 = sadd.s32 %s41, 1
      %s43 = scalar_select %p40, %s41, %s42
      %p46 = pneg %p40
      %p47 = scmp.eq.s32.totalorder %s17, 15
      %p48 = por %p46, %p47
      %p49 = scmp.ne.s32.totalorder %s41, %s44
      %p50 = scmp.eq.s32.totalorder %s17, 0
      %p51 = por %p49, %p50
      %p52 = scmp.ne.s32.totalorder %s41, %s44
      %p53 = scmp.eq.s32.totalorder %s22, 15
      %p54 = por %p52, %p53
      %p55 = scmp.ne.s32.totalorder %s44, %s45
      %p56 = scmp.eq.s32.totalorder %s22, 0
      %p57 = por %p55, %p56
      %p58 = scmp.ne.s32.totalorder %s44, %s45
      %p59 = scmp.eq.s32.totalorder %s23, 15
      %p60 = por %p58, %p59
      %p62 = scmp.ne.s32.totalorder %s45, %s61
      %p63 = scmp.eq.s32.totalorder %s23, 0
      %p64 = por %p62, %p63
      %s65 = ssub.s32 %s24, %s36
      %p66 = scmp.eq.s32.totalorder %s65, 0
      %s68 = sadd.s32 %s67, 1
      %s69 = scalar_select %p66, %s67, %s68
      %p72 = pneg %p66
      %p73 = scmp.eq.s32.totalorder %s17, 15
      %p74 = por %p72, %p73
      %p75 = scmp.ne.s32.totalorder %s67, %s70
      %p76 = scmp.eq.s32.totalorder %s17, 0
      %p77 = por %p75, %p76
      %p78 = scmp.ne.s32.totalorder %s67, %s70
      %p79 = scmp.eq.s32.totalorder %s22, 15
      %p80 = por %p78, %p79
      %p81 = scmp.ne.s32.totalorder %s70, %s71
      %p82 = scmp.eq.s32.totalorder %s22, 0
      %p83 = por %p81, %p82
      %p84 = scmp.ne.s32.totalorder %s70, %s71
      %p85 = scmp.eq.s32.totalorder %s23, 15
      %p86 = por %p84, %p85
      %p88 = scmp.ne.s32.totalorder %s71, %s87
      %p89 = scmp.eq.s32.totalorder %s23, 0
      %p90 = por %p88, %p89
      %s91 = ssub.s32 %s24, %s36
      %p92 = scmp.eq.s32.totalorder %s91, 0
      %s94 = sadd.s32 %s93, 1
      %s95 = scalar_select %p92, %s93, %s94
      %p98 = pneg %p92
      %p99 = scmp.eq.s32.totalorder %s17, 15
      %p100 = por %p98, %p99
      %p101 = scmp.ne.s32.totalorder %s93, %s96
      %p102 = scmp.eq.s32.totalorder %s17, 0
      %p103 = por %p101, %p102
      %p104 = scmp.ne.s32.totalorder %s93, %s96
      %p105 = scmp.eq.s32.totalorder %s22, 15
      %p106 = por %p104, %p105
      %p107 = scmp.ne.s32.totalorder %s96, %s97
      %p108 = scmp.eq.s32.totalorder %s22, 0
      %p109 = por %p107, %p108
      %p110 = scmp.ne.s32.totalorder %s96, %s97
      %p111 = scmp.eq.s32.totalorder %s23, 15
      %p112 = por %p110, %p111
      %p114 = scmp.ne.s32.totalorder %s97, %s113
      %p115 = scmp.eq.s32.totalorder %s23, 0
      %p116 = por %p114, %p115
      %s118 = sadd.s32 %s117, 1
      %p121 = scmp.eq.s32.totalorder %s17, 15
      %p122 = scmp.ne.s32.totalorder %s117, %s119
      %p123 = scmp.eq.s32.totalorder %s17, 0
      %p124 = por %p122, %p123
      %p125 = scmp.ne.s32.totalorder %s117, %s119
      %p126 = scmp.eq.s32.totalorder %s22, 15
      %p127 = por %p125, %p126
      %p128 = scmp.ne.s32.totalorder %s119, %s120
      %p129 = scmp.eq.s32.totalorder %s22, 0
      %p130 = por %p128, %p129
      %p131 = scmp.ne.s32.totalorder %s119, %s120
      %p132 = scmp.eq.s32.totalorder %s23, 15
      %p133 = por %p131, %p132
      %p135 = scmp.ne.s32.totalorder %s120, %s134
      %p136 = scmp.eq.s32.totalorder %s23, 0
      %p137 = por %p135, %p136
      %s139 = sadd.s32 %s138, 1
      %p142 = scmp.eq.s32.totalorder %s17, 15
      %p143 = scmp.ne.s32.totalorder %s138, %s140
      %p144 = scmp.eq.s32.totalorder %s17, 0
      %p145 = por %p143, %p144
      %p146 = scmp.ne.s32.totalorder %s138, %s140
      %p147 = scmp.eq.s32.totalorder %s22, 15
      %p148 = por %p146, %p147
      %p149 = scmp.ne.s32.totalorder %s140, %s141
      %p150 = scmp.eq.s32.totalorder %s22, 0
      %p151 = por %p149, %p150
      %p152 = scmp.ne.s32.totalorder %s140, %s141
      %p153 = scmp.eq.s32.totalorder %s23, 15
      %p154 = por %p152, %p153
      %p156 = scmp.ne.s32.totalorder %s141, %s155
      %p157 = scmp.eq.s32.totalorder %s23, 0
      %p158 = por %p156, %p157
      %s160 = sadd.s32 %s159, 1
      %p163 = scmp.eq.s32.totalorder %s17, 15
      %p164 = scmp.ne.s32.totalorder %s159, %s161
      %p165 = scmp.eq.s32.totalorder %s17, 0
      %p166 = por %p164, %p165
      %p167 = scmp.ne.s32.totalorder %s159, %s161
      %p168 = scmp.eq.s32.totalorder %s22, 15
      %p169 = por %p167, %p168
      %p170 = scmp.ne.s32.totalorder %s161, %s162
      %p171 = scmp.eq.s32.totalorder %s22, 0
      %p172 = por %p170, %p171
      %p173 = scmp.ne.s32.totalorder %s161, %s162
      %p174 = scmp.eq.s32.totalorder %s23, 15
      %p175 = por %p173, %p174
      %p177 = scmp.ne.s32.totalorder %s162, %s176
      %p178 = scmp.eq.s32.totalorder %s23, 0
      %p179 = por %p177, %p178
      %s180 = ssub.s32 %s25, %s32
      %s181 = ssub.s32 %s24, %s36
      %s182 = sor.u32 %s180, %s181
      %p183 = scmp.eq.s32.totalorder %s182, 0
      %s185 = sadd.s32 %s184, 1
      %s186 = scalar_select %p183, %s184, %s185
      %p189 = pneg %p183
      %p190 = scmp.eq.s32.totalorder %s17, 15
      %p191 = por %p189, %p190
      %p192 = scmp.ne.s32.totalorder %s184, %s187
      %p193 = scmp.eq.s32.totalorder %s17, 0
      %p194 = por %p192, %p193
      %p195 = scmp.ne.s32.totalorder %s184, %s187
      %p196 = scmp.eq.s32.totalorder %s22, 15
      %p197 = por %p195, %p196
      %p198 = scmp.ne.s32.totalorder %s187, %s188
      %p199 = scmp.eq.s32.totalorder %s22, 0
      %p200 = por %p198, %p199
      %p201 = scmp.ne.s32.totalorder %s187, %s188
      %p202 = scmp.eq.s32.totalorder %s23, 15
      %p203 = por %p201, %p202
      %p205 = scmp.ne.s32.totalorder %s188, %s204
      %p206 = scmp.eq.s32.totalorder %s23, 0
      %p207 = por %p205, %p206
      %s208 = ssub.s32 %s24, %s36
      %p209 = scmp.eq.s32.totalorder %s208, 0
      %s211 = sadd.s32 %s210, 1
      %s212 = scalar_select %p209, %s210, %s211
      %p215 = pneg %p209
      %p216 = scmp.eq.s32.totalorder %s17, 15
      %p217 = por %p215, %p216
      %p218 = scmp.ne.s32.totalorder %s210, %s213
      %p219 = scmp.eq.s32.totalorder %s17, 0
      %p220 = por %p218, %p219
      %p221 = scmp.ne.s32.totalorder %s210, %s213
      %p222 = scmp.eq.s32.totalorder %s22, 15
      %p223 = por %p221, %p222
      %p224 = scmp.ne.s32.totalorder %s213, %s214
      %p225 = scmp.eq.s32.totalorder %s22, 0
      %p226 = por %p224, %p225
      %p227 = scmp.ne.s32.totalorder %s213, %s214
      %p228 = scmp.eq.s32.totalorder %s23, 15
      %p229 = por %p227, %p228
      %p231 = scmp.ne.s32.totalorder %s214, %s230
      %p232 = scmp.eq.s32.totalorder %s23, 0
      %p233 = por %p231, %p232
      %p234 = scmp.le.s32.totalorder 1, %s17
      %p235 = scmp.lt.s32.totalorder %s17, 17
      %p236 = pnand %p234, %p235
      %p237 = pneg %p236
      // Predicated region
      $region9: #{convlstm_forward_sequence.2} parent=5 // pred_check
        _
      $region10: #{convlstm_forward_sequence.2} parent=5 // pred_check_branch
        %239 = sbr.rel (%p236) target = $region12
      $region11: #{convlstm_forward_sequence.2} parent=5 // pred_region
        %s240 = ssub.s32 %s17, 1
        // Predicated region
        $region13: #{convlstm_forward_sequence.2} parent=11 // pred_check
          %p241 = pneg %p130
        $region14: #{convlstm_forward_sequence.2} parent=11 // pred_check_branch
          %243 = sbr.rel (%p241) target = $region16
        $region15: #{convlstm_forward_sequence.2} parent=11 // pred_region
          _
        $region16: #{convlstm_forward_sequence.2} parent=11 // pred_fallthru
          _
        // Predicated region
        $region17: #{convlstm_forward_sequence.2} parent=11 // pred_check
          %p244 = pneg %p151
        $region18: #{convlstm_forward_sequence.2} parent=11 // pred_check_branch
          %246 = sbr.rel (%p244) target = $region20
        $region19: #{convlstm_forward_sequence.2} parent=11 // pred_region
          _
        $region20: #{convlstm_forward_sequence.2} parent=11 // pred_fallthru
          _
        // Predicated region
        $region21: #{convlstm_forward_sequence.2} parent=11 // pred_check
          %p247 = pneg %p172
        $region22: #{convlstm_forward_sequence.2} parent=11 // pred_check_branch
          %249 = sbr.rel (%p247) target = $region24
        $region23: #{convlstm_forward_sequence.2} parent=11 // pred_region
          _
        $region24: #{convlstm_forward_sequence.2} parent=11 // pred_fallthru
          _
      $region12: #{convlstm_forward_sequence.2} parent=5 // pred_fallthru
        _
      %p250 = scmp.lt.s32.totalorder %s17, 16
      // Predicated region
      $region25: #{convlstm_forward_sequence.2} parent=5 // pred_check
        %p251 = pneg %p250
      $region26: #{convlstm_forward_sequence.2} parent=5 // pred_check_branch
        %253 = sbr.rel (%p251) target = $region28
      $region27: #{convlstm_forward_sequence.2} parent=5 // pred_region
        // Predicated region
        $region29: #{convlstm_forward_sequence.2} parent=27 // pred_check
          %p254 = pneg %p51
        $region30: #{convlstm_forward_sequence.2} parent=27 // pred_check_branch
          %256 = sbr.rel (%p254) target = $region32
        $region31: #{convlstm_forward_sequence.2} parent=27 // pred_region
          %p257 = scmp.lt.s32.totalorder %s25, 7
          %s258 = scalar_select %p257, %s25, 7
          %p259 = scmp.lt.s32.totalorder %s24, 1
          %s260 = scalar_select %p259, %s24, 1
          %s261 = smul.addr %s260, 10
          %s262 = smul.addr %s258, 20
          %s263 = sadd.s32 %s261, %s262
          %s264 = smul.addr %s263, 4
          %s265 = scalar_lea.vmem %s0, %s264
        $region32: #{convlstm_forward_sequence.2} parent=27 // pred_fallthru
          _
        // Predicated region
        $region33: #{convlstm_forward_sequence.2} parent=27 // pred_check
          %p266 = pneg %p77
        $region34: #{convlstm_forward_sequence.2} parent=27 // pred_check_branch
          %268 = sbr.rel (%p266) target = $region36
        $region35: #{convlstm_forward_sequence.2} parent=27 // pred_region
          %p269 = scmp.lt.s32.totalorder %s24, 1
          %s270 = scalar_select %p269, %s24, 1
          %s271 = smul.addr %s270, 2
          %s272 = smul.addr %s271, 8
          %s273 = scalar_lea.vmem %s1, %s272
        $region36: #{convlstm_forward_sequence.2} parent=27 // pred_fallthru
          _
        // Predicated region
        $region37: #{convlstm_forward_sequence.2} parent=27 // pred_check
          %p274 = pneg %p103
        $region38: #{convlstm_forward_sequence.2} parent=27 // pred_check_branch
          %276 = sbr.rel (%p274) target = $region40
        $region39: #{convlstm_forward_sequence.2} parent=27 // pred_region
          %p277 = scmp.lt.s32.totalorder %s24, 1
          %s278 = scalar_select %p277, %s24, 1
          %s279 = smul.addr %s278, 2
          %s280 = smul.addr %s279, 8
          %s281 = scalar_lea.vmem %s2, %s280
        $region40: #{convlstm_forward_sequence.2} parent=27 // pred_fallthru
          _
      $region28: #{convlstm_forward_sequence.2} parent=5 // pred_fallthru
        _
      %p282 = scmp.le.s32.totalorder 1, %s17
      %p283 = scmp.lt.s32.totalorder %s17, 17
      %p284 = pnand %p282, %p283
      %p285 = pneg %p284
      // Predicated region
      $region41: #{convlstm_forward_sequence.2} parent=5 // pred_check
        _
      $region42: #{convlstm_forward_sequence.2} parent=5 // pred_check_branch
        %287 = sbr.rel (%p284) target = $region44
      $region43: #{convlstm_forward_sequence.2} parent=5 // pred_region
        %s288 = ssub.s32 %s17, 1
        %p289 = scmp.lt.s32.totalorder %s27, 7
        %s290 = scalar_select %p289, %s27, 7
        %p291 = scmp.lt.s32.totalorder %s26, 1
        %s292 = scalar_select %p291, %s26, 1
        %s293 = smul.addr %s292, 10
        %s294 = smul.addr %s290, 20
        %s295 = sadd.s32 %s293, %s294
        %s296 = smul.addr %s295, 4
        %s297 = scalar_lea.vmem %s0, %s296
        %p298 = pneg %p57
        %p299 = pneg %p54
        %p300 = scmp.lt.s32.totalorder %s26, 1
        %s301 = scalar_select %p300, %s26, 1
        %s302 = smul.addr %s301, 2
        %s303 = smul.addr %s302, 8
        %s304 = scalar_lea.vmem %s1, %s303
        %p305 = pneg %p83
        %p306 = pneg %p80
        %p307 = scmp.lt.s32.totalorder %s26, 1
        %s308 = scalar_select %p307, %s26, 1
        %s309 = smul.addr %s308, 2
        %s310 = smul.addr %s309, 8
        %s311 = scalar_lea.vmem %s2, %s310
        %p312 = pneg %p109
        %p313 = pneg %p106
        %p314 = pneg %p130
        %p315 = pneg %p127
        %p316 = pneg %p151
        %p317 = pneg %p148
        %p318 = pneg %p172
        %p319 = pneg %p169
        %p320 = pneg %p200
        %p321 = pneg %p197
        %p322 = scmp.lt.s32.totalorder %s27, 7
        %s323 = scalar_select %p322, %s27, 7
        %p324 = scmp.lt.s32.totalorder %s26, 1
        %s325 = scalar_select %p324, %s26, 1
        %s326 = smul.addr %s325, 2
        %s327 = smul.addr %s323, 4
        %s328 = sadd.s32 %s326, %s327
        %s329 = smul.addr %s328, 8
        %s330 = scalar_lea.vmem %s6, %s329
        %p331 = pneg %p226
        %p332 = pneg %p223
        %s333 = sand.u32 %s213, 1
        %s334 = scalar_lea.sflag [#allocation6], %s333
        %s335 = sand.u32 %s213, 1
        %s336 = smul.addr %s335, 16
        %s337 = scalar_lea.vmem [#allocation5], %s336
        %p338 = scmp.lt.s32.totalorder %s27, 7
        %s339 = scalar_select %p338, %s27, 7
        %p340 = scmp.lt.s32.totalorder %s26, 1
        %s341 = scalar_select %p340, %s26, 1
        %s342 = smul.addr %s341, 10
        %s343 = smul.addr %s339, 20
        %s344 = sadd.s32 %s342, %s343
        %s345 = smul.addr %s344, 4
        %s346 = scalar_lea.vmem %s0, %s345
        %p347 = scmp.lt.s32.totalorder %s26, 1
        %s348 = scalar_select %p347, %s26, 1
        %s349 = smul.addr %s348, 2
        %s350 = smul.addr %s349, 8
        %s351 = scalar_lea.vmem %s1, %s350
        %p352 = scmp.lt.s32.totalorder %s26, 1
        %s353 = scalar_select %p352, %s26, 1
        %s354 = smul.addr %s353, 2
        %s355 = smul.addr %s354, 8
        %s356 = scalar_lea.vmem %s2, %s355
        %p357 = scmp.lt.s32.totalorder %s27, 7
        %s358 = scalar_select %p357, %s27, 7
        %p359 = scmp.lt.s32.totalorder %s26, 1
        %s360 = scalar_select %p359, %s26, 1
        %s361 = smul.addr %s360, 2
        %s362 = smul.addr %s358, 4
        %s363 = sadd.s32 %s361, %s362
        %s364 = smul.addr %s363, 8
        %s365 = scalar_lea.vmem %s6, %s364
        %p367 = scmp.eq.s32.totalorder %s27, 0
        // Predicated region
        $region45: #{convlstm_forward_sequence.2} parent=43 // pred_check
          %p368 = pneg %p367
        $region46: #{convlstm_forward_sequence.2} parent=43 // pred_check_branch
          %370 = sbr.rel (%p368) target = $region48
        $region47: #{convlstm_forward_sequence.2} parent=43 // pred_region
          %371 = vst [vmem:[#allocation2] sm:$0xff] 0.0
          %372 = vst [vmem:[#allocation2 + $0x8] sm:$0xff] 0.0
          %373 = vst [vmem:[#allocation2 + $0x10] sm:$0xff] 0.0
          %374 = vst [vmem:[#allocation2 + $0x18] sm:$0xff] 0.0
          %v375 = vld [vmem:[%s351] sm:$0xff]
          %v376 = vld [vmem:[%s351 + $0x8] sm:$0xff]
          %377 = vst [vmem:[#allocation2 + $0x8] sm:$0xff] %v375
          %378 = vst [vmem:[#allocation2 + $0x10] sm:$0xff] %v376
          %v379 = vld [vmem:[%s356] sm:$0xff]
          %v380 = vld [vmem:[%s356 + $0x8] sm:$0xff]
          %381 = vst [vmem:[#allocation3] sm:$0xff] %v379
          %382 = vst [vmem:[#allocation3 + $0x8] sm:$0xff] %v380
        $region48: #{convlstm_forward_sequence.2} parent=43 // pred_fallthru
          _
        %v383 = vld [vmem:[%s346] sm:$0xff]
        %v384 = vld [vmem:[%s346 + $0x8] sm:$0xff]
        %v385 = vld [vmem:[%s346 + $0x10] sm:$0xff]
        %v386 = vld [vmem:[%s346 + $0x18] sm:$0xff]
        %v387 = vld [vmem:[%s346 + $0x20] sm:$0x33]
        %v388 = vunpack.c.l.bf16 %v383
        %v389 = vunpack.c.h.bf16 %v383
        %v390 = vunpack.c.l.bf16 %v384
        %v391 = vunpack.c.h.bf16 %v384
        %v392 = vunpack.c.l.bf16 %v385
        %v393 = vunpack.c.h.bf16 %v385
        %v394 = vunpack.c.l.bf16 %v386
        %v395 = vunpack.c.h.bf16 %v386
        %v396 = vunpack.c.l.bf16 %v387
        %v397 = vunpack.c.h.bf16 %v387
        %398 = vst [vmem:[#allocation4] sm:$0xff] %v388
        %399 = vst [vmem:[#allocation4 + $0x8] sm:$0xff] %v389
        %400 = vst [vmem:[#allocation4 + $0x10] sm:$0xff] %v390
        %401 = vst [vmem:[#allocation4 + $0x18] sm:$0xff] %v391
        %402 = vst [vmem:[#allocation4 + $0x20] sm:$0xff] %v392
        %403 = vst [vmem:[#allocation4 + $0x28] sm:$0xff] %v393
        %404 = vst [vmem:[#allocation4 + $0x30] sm:$0xff] %v394
        %405 = vst [vmem:[#allocation4 + $0x38] sm:$0xff] %v395
        %406 = vst [vmem:[#allocation4 + $0x40] sm:$0xf] %v396
        %407 = vst [vmem:[#allocation4 + $0x48] sm:$0xf] %v397
        %v408 = vld [vmem:[#allocation2] sm:$0xff]
        %v409 = vld [vmem:[#allocation2 + $0x8] sm:$0xff]
        %v410 = vld [vmem:[#allocation2 + $0x10] sm:$0xff]
        %v411 = vld [vmem:[#allocation2 + $0x18] sm:$0xff]
        %v412 = vld [vmem:[%s5] sm:$0x3]
        %v414 = vlaneseq
        %v415 = vshrl.u32 %v414, 7
        %v416 = vsub.s32 0, %v415
        %v417 = vrot.slane %v412, %v416
        %v418 = vlaneseq
        %v419 = vshrl.u32 %v418, 7
        %v420 = vsub.s32 1, %v419
        %v421 = vrot.slane %v412, %v420
        %422 = vrot.lane.b32.xlu0 %v417, 111
        %v423 = vpop.permute.xlu0 %422
        %424 = vrot.lane.b32.xlu0 %v421, 111
        %v425 = vpop.permute.xlu0 %424
        %vm426 = vcmask 908288
        %v427 = vsel %vm426, %v423, %v425
        %v431 = vmul.f32 %v408, %v423
        %v432 = vmul.f32 %v409, %v427
        %v433 = vmul.f32 %v410, %v425
        %v437 = vrot.slane %v431, 4
        %v438 = vrot.slane %v432, 4
        %v439 = vrot.slane %v433, 4
        %440 = vrot.lane.b32.xlu0 %v437, 17
        %v441 = vpop.permute.xlu0 %440
        %442 = vrot.lane.b32.xlu0 %v438, 17
        %v443 = vpop.permute.xlu0 %442
        %444 = vrot.lane.b32.xlu0 %v439, 17
        %v445 = vpop.permute.xlu0 %444
        %vm446 = vcmask 138240
        %v447 = vsel %vm446, %v441, %v443
        %v448 = vsel %vm446, %v443, %v445
        %451 = vst [vmem:[#allocation4 + $0x40] sm:$0xf0] %v447
        %452 = vst [vmem:[#allocation4 + $0x48] sm:$0xf0] %v448
        %453 = vst [vmem:[#allocation4 + $0x50] sm:$0xf] %v447
        %454 = vst [vmem:[#allocation4 + $0x58] sm:$0xf] %v448
        %s455 = scalar_lea.vmem %s5, 2
        %v456 = vld [vmem:[%s455] sm:$0x3]
        %v458 = vlaneseq
        %v459 = vshrl.u32 %v458, 7
        %v460 = vsub.s32 0, %v459
        %v461 = vrot.slane %v456, %v460
        %v462 = vlaneseq
        %v463 = vshrl.u32 %v462, 7
        %v464 = vsub.s32 1, %v463
        %v465 = vrot.slane %v456, %v464
        %466 = vrot.lane.b32.xlu0 %v461, 112
        %v467 = vpop.permute.xlu0 %466
        %468 = vrot.lane.b32.xlu0 %v465, 112
        %v469 = vpop.permute.xlu0 %468
        %vm470 = vcmask 916480
        %v471 = vsel %vm470, %v467, %v469
        %v475 = vmul.f32 %v408, %v467
        %v476 = vmul.f32 %v409, %v471
        %v477 = vmul.f32 %v410, %v469
        %v481 = vrot.slane %v475, 4
        %v482 = vrot.slane %v476, 4
        %v483 = vrot.slane %v477, 4
        %484 = vrot.lane.b32.xlu0 %v481, 16
        %v485 = vpop.permute.xlu0 %484
        %486 = vrot.lane.b32.xlu0 %v482, 16
        %v487 = vpop.permute.xlu0 %486
        %488 = vrot.lane.b32.xlu0 %v483, 16
        %v489 = vpop.permute.xlu0 %488
        %vm490 = vcmask 130048
        %v491 = vsel %vm490, %v485, %v487
        %v492 = vsel %vm490, %v487, %v489
        %495 = vst [vmem:[#allocation4 + $0x50] sm:$0xf0] %v491
        %496 = vst [vmem:[#allocation4 + $0x58] sm:$0xf0] %v492
        %497 = vst [vmem:[#allocation4 + $0x60] sm:$0xf] %v491
        %498 = vst [vmem:[#allocation4 + $0x68] sm:$0xf] %v492
        %s499 = scalar_lea.vmem %s5, 4
        %v500 = vld [vmem:[%s499] sm:$0x3]
        %v502 = vlaneseq
        %v503 = vshrl.u32 %v502, 7
        %v504 = vsub.s32 0, %v503
        %v505 = vrot.slane %v500, %v504
        %v506 = vlaneseq
        %v507 = vshrl.u32 %v506, 7
        %v508 = vsub.s32 1, %v507
        %v509 = vrot.slane %v500, %v508
        %510 = vrot.lane.b32.xlu0 %v505, 113
        %v511 = vpop.permute.xlu0 %510
        %512 = vrot.lane.b32.xlu0 %v509, 113
        %v513 = vpop.permute.xlu0 %512
        %vm514 = vcmask 924672
        %v515 = vsel %vm514, %v511, %v513
        %v519 = vmul.f32 %v408, %v511
        %v520 = vmul.f32 %v409, %v515
        %v521 = vmul.f32 %v410, %v513
        %v525 = vrot.slane %v519, 4
        %v526 = vrot.slane %v520, 4
        %v527 = vrot.slane %v521, 4
        %528 = vrot.lane.b32.xlu0 %v525, 15
        %v529 = vpop.permute.xlu0 %528
        %530 = vrot.lane.b32.xlu0 %v526, 15
        %v531 = vpop.permute.xlu0 %530
        %532 = vrot.lane.b32.xlu0 %v527, 15
        %v533 = vpop.permute.xlu0 %532
        %vm534 = vcmask 121856
        %v535 = vsel %vm534, %v529, %v531
        %v536 = vsel %vm534, %v531, %v533
        %539 = vst [vmem:[#allocation4 + $0x60] sm:$0xf0] %v535
        %540 = vst [vmem:[#allocation4 + $0x68] sm:$0xf0] %v536
        %541 = vst [vmem:[#allocation4 + $0x70] sm:$0xf] %v535
        %542 = vst [vmem:[#allocation4 + $0x78] sm:$0xf] %v536
        %s543 = scalar_lea.vmem %s5, 6
        %v544 = vld [vmem:[%s543] sm:$0x3]
        %v546 = vlaneseq
        %v547 = vshrl.u32 %v546, 7
        %v548 = vsub.s32 0, %v547
        %v549 = vrot.slane %v544, %v548
        %v550 = vlaneseq
        %v551 = vshrl.u32 %v550, 7
        %v552 = vsub.s32 1, %v551
        %v553 = vrot.slane %v544, %v552
        %554 = vrot.lane.b32.xlu0 %v549, 127
        %v555 = vpop.permute.xlu0 %554
        %556 = vrot.lane.b32.xlu0 %v553, 127
        %v557 = vpop.permute.xlu0 %556
        %vm558 = vcmask 1039360
        %v559 = vsel %vm558, %v555, %v557
        %v563 = vmul.f32 %v408, %v555
        %v564 = vmul.f32 %v409, %v559
        %v565 = vmul.f32 %v410, %v557
        %v569 = vrot.slane %v563, 4
        %v570 = vrot.slane %v564, 4
        %v571 = vrot.slane %v565, 4
        %572 = vrot.lane.b32.xlu0 %v569, 1
        %v573 = vpop.permute.xlu0 %572
        %574 = vrot.lane.b32.xlu0 %v570, 1
        %v575 = vpop.permute.xlu0 %574
        %576 = vrot.lane.b32.xlu0 %v571, 1
        %v577 = vpop.permute.xlu0 %576
        %vm578 = vcmask 7168
        %v579 = vsel %vm578, %v573, %v575
        %v580 = vsel %vm578, %v575, %v577
        %583 = vst [vmem:[#allocation4 + $0x70] sm:$0xf0] %v579
        %584 = vst [vmem:[#allocation4 + $0x78] sm:$0xf0] %v580
        %585 = vst [vmem:[#allocation4 + $0x80] sm:$0xf] %v579
        %586 = vst [vmem:[#allocation4 + $0x88] sm:$0xf] %v580
        %s587 = scalar_lea.vmem %s5, 8
        %v588 = vld [vmem:[%s587] sm:$0x3]
        %v590 = vlaneseq
        %v591 = vshrl.u32 %v590, 7
        %v592 = vsub.s32 0, %v591
        %v593 = vrot.slane %v588, %v592
        %v594 = vlaneseq
        %v595 = vshrl.u32 %v594, 7
        %v596 = vsub.s32 1, %v595
        %v597 = vrot.slane %v588, %v596
        %v600 = vmul.f32 %v409, %v593
        %v601 = vmul.f32 %v410, %v597
        %v604 = vrot.slane %v600, 4
        %v605 = vrot.slane %v601, 4
        %608 = vst [vmem:[#allocation4 + $0x80] sm:$0xf0] %v604
        %609 = vst [vmem:[#allocation4 + $0x88] sm:$0xf0] %v605
        %610 = vst [vmem:[#allocation4 + $0x90] sm:$0xf] %v604
        %611 = vst [vmem:[#allocation4 + $0x98] sm:$0xf] %v605
        %s612 = scalar_lea.vmem %s5, 10
        %v613 = vld [vmem:[%s612] sm:$0x3]
        %v615 = vlaneseq
        %v616 = vshrl.u32 %v615, 7
        %v617 = vsub.s32 0, %v616
        %v618 = vrot.slane %v613, %v617
        %v619 = vlaneseq
        %v620 = vshrl.u32 %v619, 7
        %v621 = vsub.s32 1, %v620
        %v622 = vrot.slane %v613, %v621
        %623 = vrot.lane.b32.xlu0 %v618, 1
        %v624 = vpop.permute.xlu0 %623
        %625 = vrot.lane.b32.xlu0 %v622, 1
        %v626 = vpop.permute.xlu0 %625
        %v627 = vsel %vm578, %v624, %v626
        %v631 = vmul.f32 %v409, %v624
        %v632 = vmul.f32 %v410, %v627
        %v633 = vmul.f32 %v411, %v626
        %v637 = vrot.slane %v631, 4
        %v638 = vrot.slane %v632, 4
        %v639 = vrot.slane %v633, 4
        %640 = vrot.lane.b32.xlu0 %v637, 127
        %v641 = vpop.permute.xlu0 %640
        %642 = vrot.lane.b32.xlu0 %v638, 127
        %v643 = vpop.permute.xlu0 %642
        %644 = vrot.lane.b32.xlu0 %v639, 127
        %v645 = vpop.permute.xlu0 %644
        %v646 = vsel %vm558, %v641, %v643
        %v647 = vsel %vm558, %v643, %v645
        %650 = vst [vmem:[#allocation4 + $0x90] sm:$0xf0] %v646
        %651 = vst [vmem:[#allocation4 + $0x98] sm:$0xf0] %v647
        %652 = vst [vmem:[#allocation4 + $0xa0] sm:$0xf] %v646
        %653 = vst [vmem:[#allocation4 + $0xa8] sm:$0xf] %v647
        %s654 = scalar_lea.vmem %s5, 12
        %v655 = vld [vmem:[%s654] sm:$0x3]
        %v657 = vlaneseq
        %v658 = vshrl.u32 %v657, 7
        %v659 = vsub.s32 0, %v658
        %v660 = vrot.slane %v655, %v659
        %v661 = vlaneseq
        %v662 = vshrl.u32 %v661, 7
        %v663 = vsub.s32 1, %v662
        %v664 = vrot.slane %v655, %v663
        %665 = vrot.lane.b32.xlu0 %v660, 15
        %v666 = vpop.permute.xlu0 %665
        %667 = vrot.lane.b32.xlu0 %v664, 15
        %v668 = vpop.permute.xlu0 %667
        %v669 = vsel %vm534, %v666, %v668
        %v673 = vmul.f32 %v409, %v666
        %v674 = vmul.f32 %v410, %v669
        %v675 = vmul.f32 %v411, %v668
        %v679 = vrot.slane %v673, 4
        %v680 = vrot.slane %v674, 4
        %v681 = vrot.slane %v675, 4
        %682 = vrot.lane.b32.xlu0 %v679, 113
        %v683 = vpop.permute.xlu0 %682
        %684 = vrot.lane.b32.xlu0 %v680, 113
        %v685 = vpop.permute.xlu0 %684
        %686 = vrot.lane.b32.xlu0 %v681, 113
        %v687 = vpop.permute.xlu0 %686
        %v688 = vsel %vm514, %v683, %v685
        %v689 = vsel %vm514, %v685, %v687
        %692 = vst [vmem:[#allocation4 + $0xa0] sm:$0xf0] %v688
        %693 = vst [vmem:[#allocation4 + $0xa8] sm:$0xf0] %v689
        %694 = vst [vmem:[#allocation4 + $0xb0] sm:$0xf] %v688
        %695 = vst [vmem:[#allocation4 + $0xb8] sm:$0xf] %v689
        %s696 = scalar_lea.vmem %s5, 14
        %v697 = vld [vmem:[%s696] sm:$0x3]
        %v699 = vlaneseq
        %v700 = vshrl.u32 %v699, 7
        %v701 = vsub.s32 0, %v700
        %v702 = vrot.slane %v697, %v701
        %v703 = vlaneseq
        %v704 = vshrl.u32 %v703, 7
        %v705 = vsub.s32 1, %v704
        %v706 = vrot.slane %v697, %v705
        %707 = vrot.lane.b32.xlu0 %v702, 16
        %v708 = vpop.permute.xlu0 %707
        %709 = vrot.lane.b32.xlu0 %v706, 16
        %v710 = vpop.permute.xlu0 %709
        %v711 = vsel %vm490, %v708, %v710
        %v715 = vmul.f32 %v409, %v708
        %v716 = vmul.f32 %v410, %v711
        %v717 = vmul.f32 %v411, %v710
        %v721 = vrot.slane %v715, 4
        %v722 = vrot.slane %v716, 4
        %v723 = vrot.slane %v717, 4
        %724 = vrot.lane.b32.xlu0 %v721, 112
        %v725 = vpop.permute.xlu0 %724
        %726 = vrot.lane.b32.xlu0 %v722, 112
        %v727 = vpop.permute.xlu0 %726
        %728 = vrot.lane.b32.xlu0 %v723, 112
        %v729 = vpop.permute.xlu0 %728
        %v730 = vsel %vm470, %v725, %v727
        %v731 = vsel %vm470, %v727, %v729
        %734 = vst [vmem:[#allocation4 + $0xb0] sm:$0xf0] %v730
        %735 = vst [vmem:[#allocation4 + $0xb8] sm:$0xf0] %v731
        %736 = vst [vmem:[#allocation4 + $0xc0] sm:$0xf] %v730
        %737 = vst [vmem:[#allocation4 + $0xc8] sm:$0xf] %v731
        %s738 = scalar_lea.vmem %s5, 16
        %v739 = vld [vmem:[%s738] sm:$0x3]
        %v741 = vlaneseq
        %v742 = vshrl.u32 %v741, 7
        %v743 = vsub.s32 0, %v742
        %v744 = vrot.slane %v739, %v743
        %v745 = vlaneseq
        %v746 = vshrl.u32 %v745, 7
        %v747 = vsub.s32 1, %v746
        %v748 = vrot.slane %v739, %v747
        %749 = vrot.lane.b32.xlu0 %v744, 17
        %v750 = vpop.permute.xlu0 %749
        %751 = vrot.lane.b32.xlu0 %v748, 17
        %v752 = vpop.permute.xlu0 %751
        %v753 = vsel %vm446, %v750, %v752
        %v757 = vmul.f32 %v409, %v750
        %v758 = vmul.f32 %v410, %v753
        %v759 = vmul.f32 %v411, %v752
        %v763 = vrot.slane %v757, 4
        %v764 = vrot.slane %v758, 4
        %v765 = vrot.slane %v759, 4
        %766 = vrot.lane.b32.xlu0 %v763, 111
        %v767 = vpop.permute.xlu0 %766
        %768 = vrot.lane.b32.xlu0 %v764, 111
        %v769 = vpop.permute.xlu0 %768
        %770 = vrot.lane.b32.xlu0 %v765, 111
        %v771 = vpop.permute.xlu0 %770
        %v772 = vsel %vm426, %v767, %v769
        %v773 = vsel %vm426, %v769, %v771
        %776 = vst [vmem:[#allocation4 + $0xc0] sm:$0xf0] %v772
        %777 = vst [vmem:[#allocation4 + $0xc8] sm:$0xf0] %v773
        %778 = vst [vmem:[#allocation4 + $0xd0] sm:$0xf] %v772
        %779 = vst [vmem:[#allocation4 + $0xd8] sm:$0xf] %v773
        %v780 = vld [vmem:[%s3] sm:$0xf]
        %v781 = vld [vmem:[%s3 + $0x4] sm:$0xf]
        %v782 = vld [vmem:[%s3 + $0x8] sm:$0xf]
        %v783 = vld [vmem:[%s3 + $0xc] sm:$0xf]
        %v784 = vld [vmem:[#allocation4] sm:$0xff]
        %v785 = vld [vmem:[#allocation4 + $0x8] sm:$0xff]
        %v786 = vld [vmem:[#allocation4 + $0x10] sm:$0xff]
        %v787 = vld [vmem:[#allocation4 + $0x18] sm:$0xff]
        %v788 = vld [vmem:[#allocation4 + $0x20] sm:$0xff]
        %v789 = vld [vmem:[#allocation4 + $0x28] sm:$0xff]
        %v790 = vld [vmem:[#allocation4 + $0x30] sm:$0xff]
        %v791 = vld [vmem:[#allocation4 + $0x38] sm:$0xff]
        %v792 = vld [vmem:[#allocation4 + $0x40] sm:$0xff]
        %v793 = vld [vmem:[#allocation4 + $0x48] sm:$0xff]
        %v794 = vld [vmem:[#allocation4 + $0x50] sm:$0xff]
        %v795 = vld [vmem:[#allocation4 + $0x58] sm:$0xff]
        %v796 = vld [vmem:[#allocation4 + $0x60] sm:$0xff]
        %v797 = vld [vmem:[#allocation4 + $0x68] sm:$0xff]
        %v798 = vld [vmem:[#allocation4 + $0x70] sm:$0xff]
        %v799 = vld [vmem:[#allocation4 + $0x78] sm:$0xff]
        %v800 = vld [vmem:[#allocation4 + $0x80] sm:$0xff]
        %v801 = vld [vmem:[#allocation4 + $0x88] sm:$0xff]
        %v802 = vld [vmem:[#allocation4 + $0x90] sm:$0xff]
        %v803 = vld [vmem:[#allocation4 + $0x98] sm:$0xff]
        %v804 = vld [vmem:[#allocation4 + $0xa0] sm:$0xff]
        %v805 = vld [vmem:[#allocation4 + $0xa8] sm:$0xff]
        %v806 = vld [vmem:[#allocation4 + $0xb0] sm:$0xff]
        %v807 = vld [vmem:[#allocation4 + $0xb8] sm:$0xff]
        %v808 = vld [vmem:[#allocation4 + $0xc0] sm:$0xff]
        %v809 = vld [vmem:[#allocation4 + $0xc8] sm:$0xff]
        %v810 = vld [vmem:[#allocation4 + $0xd0] sm:$0xf]
        %v811 = vld [vmem:[#allocation4 + $0xd8] sm:$0xf]
        %v812 = vpack.c.bf16 %v786, %v784
        %v813 = vpack.c.bf16 %v787, %v785
        %v814 = vpack.c.bf16 %v790, %v788
        %v815 = vpack.c.bf16 %v791, %v789
        %v816 = vpack.c.bf16 %v794, %v792
        %v817 = vpack.c.bf16 %v795, %v793
        %v818 = vpack.c.bf16 %v798, %v796
        %v819 = vpack.c.bf16 %v799, %v797
        %v820 = vpack.c.bf16 %v802, %v800
        %v821 = vpack.c.bf16 %v803, %v801
        %v822 = vpack.c.bf16 %v806, %v804
        %v823 = vpack.c.bf16 %v807, %v805
        %v824 = vpack.c.bf16 %v810, %v808
        %v825 = vpack.c.bf16 %v811, %v809
        %v826 = vld [vmem:[%s4] sm:$0xff]
        %v827 = vld [vmem:[%s4 + $0x8] sm:$0xff]
        %v828 = vld [vmem:[%s4 + $0x10] sm:$0xff]
        %v829 = vld [vmem:[%s4 + $0x18] sm:$0xff]
        %831 = vset.pattern.permute.xlu0 0
        %832 = vperm.xlu0 %831, %v826
        %v833 = vpop.permute.xlu0 %832
        %836 = vset.pattern.permute.xlu0 0
        %837 = vperm.xlu0 %836, %v827
        %v838 = vpop.permute.xlu0 %837
        %841 = vset.pattern.permute.xlu0 0
        %842 = vperm.xlu0 %841, %v828
        %v843 = vpop.permute.xlu0 %842
        %846 = vset.pattern.permute.xlu0 0
        %847 = vperm.xlu0 %846, %v829
        %v848 = vpop.permute.xlu0 %847
        %v854 = vunpack.c.l.b16 %v780
        %v855 = vunpack.c.l.b16 %v781
        %v856 = vunpack.c.l.b16 %v782
        %v857 = vunpack.c.l.b16 %v783
        %v858 = vpack.c.b16 %v855, %v854
        %v859 = vpack.c.b16 %v857, %v856
        %vm860 = vcmask 883712
        %v862 = vsel %vm860, %v858, 0
        %v865 = vsel %vm860, %v859, 0
        %vm867 = vcmask 1045504
        %v869 = vsel %vm867, %v824, 0
        %v872 = vsel %vm867, %v825, 0
        %874 = vmatprep.subr.bf16.mxu0 0
        %875 = vmatpush1.bf16.msra.mxu0 0
        %876 = vmatprep.subr.bf16.mxu0 %v872
        %877 = vmatpush1.bf16.msra.mxu0 %v869
        %878 = vmatprep.subr.bf16.mxu0 %v823
        %879 = vmatpush1.bf16.msra.mxu0 %v822
        %880 = vmatprep.subr.bf16.mxu0 %v821
        %881 = vmatpush1.bf16.msra.mxu0 %v820
        %882 = vmatprep.subr.bf16.mxu0 %v819
        %883 = vmatpush1.bf16.msra.mxu0 %v818
        %884 = vmatprep.subr.bf16.mxu0 %v817
        %885 = vmatpush1.bf16.msra.mxu0 %v816
        %886 = vmatprep.subr.bf16.mxu0 %v815
        %887 = vmatpush1.bf16.msra.mxu0 %v814
        %888 = vmatprep.subr.bf16.mxu0 %v813
        %889 = vmatpush1.bf16.msra.mxu0 %v812
        %890 = vmatprep.subr.bf16.mxu0 0
        %891 = vmatpush2.bf16.msra.mxu0 0
        %892 = vmatprep.subr.bf16.mxu0 0
        %893 = vmatpush2.bf16.msra.mxu0 0
        %894 = vmatprep.subr.bf16.mxu0 0
        %895 = vmatpush2.bf16.msra.mxu0 0
        %896 = vmatprep.subr.bf16.mxu0 0
        %897 = vmatpush2.bf16.msra.mxu0 0
        %898 = vmatprep.subr.bf16.mxu0 0
        %899 = vmatpush2.bf16.msra.mxu0 0
        %900 = vmatprep.subr.bf16.mxu0 0
        %901 = vmatpush2.bf16.msra.mxu0 0
        %902 = vmatprep.subr.bf16.mxu0 0
        %903 = vmatpush2.bf16.msra.mxu0 0
        %904 = vmatprep.subr.bf16.mxu0 0
        %905 = vmatpush2.bf16.msra.mxu0 0
        %906 = vmatprep.mubr.bf16.mxu0 0
        %907 = vmatmul.mubr.bf16.gmra.mxu0 %v862
        %v908 = vpop.f32.mrf.mxu0
        %v909 = vadd.f32 %v833, %v908
        %v910 = vpop.f32.mrf.mxu0
        %v911 = vadd.f32 %v833, %v910
        %v912 = vpop.f32.mrf.mxu0
        %v913 = vadd.f32 %v838, %v912
        %v914 = vpop.f32.mrf.mxu0
        %v915 = vadd.f32 %v838, %v914
        %916 = vmatprep.mubr.bf16.mxu0 0
        %917 = vmatmul.mubr.bf16.gmra.mxu0 %v865
        %v918 = vpop.f32.mrf.mxu0
        %v919 = vadd.f32 %v843, %v918
        %v920 = vpop.f32.mrf.mxu0
        %v921 = vadd.f32 %v843, %v920
        %v922 = vpop.f32.mrf.mxu0
        %v923 = vadd.f32 %v848, %v922
        %v924 = vpop.f32.mrf.mxu0
        %v925 = vadd.f32 %v848, %v924
        %926 = vdwg.mxu0
        %v927 = vld [vmem:[#allocation3] sm:$0xff]
        %v928 = vld [vmem:[#allocation3 + $0x8] sm:$0xff]
        %v929 = vxor.u32 %v909, 2147483648
        %v930 = vxor.u32 %v911, 2147483648
        %v931 = vmul.f32 %v929, 1.442695
        %v932 = vpow.pop %v931
        %v933 = vmul.f32 %v930, 1.442695
        %v934 = vpow.pop %v933
        %v935 = vadd.f32 %v932, 1.0
        %v936 = vadd.f32 %v934, 1.0
        %v937 = vrcp.pop %v935
        %v938 = vmul.f32 1.0, %v937
        %v939 = vrcp.pop %v936
        %v940 = vmul.f32 1.0, %v939
        %v941 = vxor.u32 %v913, 2147483648
        %v942 = vxor.u32 %v915, 2147483648
        %v943 = vmul.f32 %v941, 1.442695
        %v944 = vpow.pop %v943
        %v945 = vmul.f32 %v942, 1.442695
        %v946 = vpow.pop %v945
        %v947 = vadd.f32 %v944, 1.0
        %v948 = vadd.f32 %v946, 1.0
        %v949 = vrcp.pop %v947
        %v950 = vmul.f32 1.0, %v949
        %v951 = vrcp.pop %v948
        %v952 = vmul.f32 1.0, %v951
        %v953 = vmul.f32 %v950, %v927
        %v954 = vmul.f32 %v952, %v928
        %v955 = vtanh.pop %v919
        %v956 = vtanh.pop %v921
        %v957 = vmul.f32 %v938, %v955
        %v958 = vmul.f32 %v940, %v956
        %v959 = vadd.f32 %v953, %v957
        %v960 = vadd.f32 %v954, %v958
        %v961 = vxor.u32 %v923, 2147483648
        %v962 = vxor.u32 %v925, 2147483648
        %v963 = vmul.f32 %v961, 1.442695
        %v964 = vpow.pop %v963
        %v965 = vmul.f32 %v962, 1.442695
        %v966 = vpow.pop %v965
        %v967 = vadd.f32 %v964, 1.0
        %v968 = vadd.f32 %v966, 1.0
        %v969 = vrcp.pop %v967
        %v970 = vmul.f32 1.0, %v969
        %v971 = vrcp.pop %v968
        %v972 = vmul.f32 1.0, %v971
        %v973 = vtanh.pop %v959
        %v974 = vtanh.pop %v960
        %v975 = vmul.f32 %v970, %v973
        %v976 = vmul.f32 %v972, %v974
        %977 = vst [vmem:[#allocation3] sm:$0xff] %v959
        %978 = vst [vmem:[#allocation3 + $0x8] sm:$0xff] %v960
        %979 = vst [vmem:[#allocation2 + $0x8] sm:$0xff] %v975
        %980 = vst [vmem:[#allocation2 + $0x10] sm:$0xff] %v976
        %981 = vst [vmem:[%s365] sm:$0xff] %v975
        %982 = vst [vmem:[%s365 + $0x8] sm:$0xff] %v976
        %983 = vst [vmem:[%s337] sm:$0xff] %v959
        %984 = vst [vmem:[%s337 + $0x8] sm:$0xff] %v960
        %p985 = scmp.lt.s32.totalorder %s27, 7
        %s986 = scalar_select %p985, %s27, 7
        %p987 = scmp.lt.s32.totalorder %s26, 1
        %s988 = scalar_select %p987, %s26, 1
        %s989 = smul.addr %s988, 2
        %s990 = smul.addr %s986, 4
        %s991 = sadd.s32 %s989, %s990
        %s992 = smul.addr %s991, 8
        %s993 = scalar_lea.vmem %s6, %s992
        %s994 = sand.u32 %s213, 1
        %s995 = scalar_lea.sflag [#allocation6], %s994
        %s996 = sand.u32 %s213, 1
        %s997 = smul.addr %s996, 16
        %s998 = scalar_lea.vmem [#allocation5], %s997
        // Predicated region
        $region49: #{convlstm_forward_sequence.2} parent=43 // pred_check
          %p999 = pneg %p197
        $region50: #{convlstm_forward_sequence.2} parent=43 // pred_check_branch
          %1001 = sbr.rel (%p999) target = $region52
        $region51: #{convlstm_forward_sequence.2} parent=43 // pred_region
          _
        $region52: #{convlstm_forward_sequence.2} parent=43 // pred_fallthru
          _
        // Predicated region
        $region53: #{convlstm_forward_sequence.2} parent=43 // pred_check
          %p1002 = pneg %p223
        $region54: #{convlstm_forward_sequence.2} parent=43 // pred_check_branch
          %1004 = sbr.rel (%p1002) target = $region56
        $region55: #{convlstm_forward_sequence.2} parent=43 // pred_region
          %s1006 = ssub.s32 256, 256
          %1007 = vsyncadd %s995, %s1006
          %s1008 = smul.addr %s26, 2
          %s1009 = smul.addr %s1008, 128
          %s1010 = scalar_lea.hbm %s7, %s1009
          %s1012 = sshll.u32 %s998, 4
          %s1013 = int_to_ptr.vmem [resolvable:$true] %s1012
          %1015 = dma.vmem_to_hbm [thread:$0]  %s1013, 256, %s1010, %s995
        $region56: #{convlstm_forward_sequence.2} parent=43 // pred_fallthru
          _
      $region44: #{convlstm_forward_sequence.2} parent=5 // pred_fallthru
        _
      %p1016 = scmp.le.s32.totalorder 2, %s17
      // Predicated region
      $region57: #{convlstm_forward_sequence.2} parent=5 // pred_check
        %p1017 = pneg %p1016
      $region58: #{convlstm_forward_sequence.2} parent=5 // pred_check_branch
        %1019 = sbr.rel (%p1017) target = $region60
      $region59: #{convlstm_forward_sequence.2} parent=5 // pred_region
        %s1020 = ssub.s32 %s17, 2
        // Predicated region
        $region61: #{convlstm_forward_sequence.2} parent=59 // pred_check
          %p1021 = pneg %p203
        $region62: #{convlstm_forward_sequence.2} parent=59 // pred_check_branch
          %1023 = sbr.rel (%p1021) target = $region64
        $region63: #{convlstm_forward_sequence.2} parent=59 // pred_region
          %p1024 = scmp.lt.s32.totalorder %s29, 7
          %s1025 = scalar_select %p1024, %s29, 7
          %p1026 = scmp.lt.s32.totalorder %s28, 1
          %s1027 = scalar_select %p1026, %s28, 1
          %s1028 = smul.addr %s1027, 2
          %s1029 = smul.addr %s1025, 4
          %s1030 = sadd.s32 %s1028, %s1029
          %s1031 = smul.addr %s1030, 8
          %s1032 = scalar_lea.vmem %s6, %s1031
        $region64: #{convlstm_forward_sequence.2} parent=59 // pred_fallthru
          _
        // Predicated region
        $region65: #{convlstm_forward_sequence.2} parent=59 // pred_check
          %p1033 = pneg %p229
        $region66: #{convlstm_forward_sequence.2} parent=59 // pred_check_branch
          %1035 = sbr.rel (%p1033) target = $region68
        $region67: #{convlstm_forward_sequence.2} parent=59 // pred_region
          %s1036 = sand.u32 %s214, 1
          %s1037 = scalar_lea.sflag [#allocation6], %s1036
          %s1038 = sand.u32 %s214, 1
          %s1039 = smul.addr %s1038, 16
          %s1040 = scalar_lea.vmem [#allocation5], %s1039
          %1041 = dma.done %s1037, 256
        $region68: #{convlstm_forward_sequence.2} parent=59 // pred_fallthru
          _
      $region60: #{convlstm_forward_sequence.2} parent=5 // pred_fallthru
        _
    $region6: #{convlstm_forward_sequence.2} parent=1 // loop_footer
      %s21 = sadd.s32 1, %s17
    $region7: #{convlstm_forward_sequence.2} parent=1 // loop_footer_branch
      %16 = sbr.rel target = $region3
    $region8: #{convlstm_forward_sequence.2} parent=1 // loop_exit
      _
    %1042 = vsyncpa [#allocation6], 1
    %s1043 = scalar_lea.sflag [#allocation6], 1
    %1044 = vsyncpa %s1043, 1

// kernel: convlstm_forward_sequence.3
$region0: #{convlstm_forward_sequence.3}
  #allocation0 [shape = 'u32[]', space=smem, size = 0x4, offset = 0x4, fixed_abs, tag = 'smem constant byte address 0x4 - core index']
  #allocation1 [shape = 'u32[144,128]{1,0:T(1,128)}', space=vmem, size = 0x12000, scoped, tag = 'internal scratch']
  #allocation2 [shape = 'f32[16,512]{1,0:T(8,128)}', space=vmem, size = 0x8000, scoped, tag = 'scratch operand']
  #allocation3 [shape = 'f32[16,256]{1,0:T(8,128)}', space=vmem, size = 0x4000, scoped, tag = 'scratch operand']
  #allocation4 [shape = 'f32[216,256]{1,0:T(8,128)}', space=vmem, size = 0x36000, scoped, tag = 'scratch operand']
  %s0 = inlined_call_operand.vmem [shape: bf16[8,2,72,256], index: 0, kind: input, shape index: {}]
  %s1 = inlined_call_operand.vmem [shape: f32[2,16,256], index: 1, kind: input, shape index: {}]
  %s2 = inlined_call_operand.vmem [shape: f32[2,16,256], index: 2, kind: input, shape index: {}]
  %s3 = inlined_call_operand.vmem [shape: bf16[64,216], index: 3, kind: input, shape index: {}]
  %s4 = inlined_call_operand.vmem [shape: f32[64,1], index: 4, kind: input, shape index: {}]
  %s5 = inlined_call_operand.vmem [shape: f32[9,1,256], index: 5, kind: input, shape index: {}]
  %s6 = inlined_call_operand.vmem [shape: f32[8,2,16,256], index: 6, kind: output, shape index: {0}]
  %s7 = inlined_call_operand.vmem [shape: f32[2,16,256], index: 7, kind: output, shape index: {1}]
  %8 = xla_tuple %s6, %s7
  %s9 = sld [smem:[#allocation0]]
  $region69: #{convlstm_forward_sequence.3} parent=0
    _
  %s11 = ssub.s32 1, %s9
  %s12 = scalar_select 0, %s11, %s9
  loop: start=0, step=1, limit=18
  $region2: #{convlstm_forward_sequence.3} parent=0 // loop_pre_header
    _
  $region3: #{convlstm_forward_sequence.3} parent=0 // loop_header
    %s14 = sphi 0, %s18
    %p15 = scmp.ge.s32.totalorder %s14, 18
    %s21 = sphi 0, %s33
    %s22 = sphi 0, %s29
    %s23 = sphi 0, %s21
    %s24 = sphi 0, %s22
    %s25 = sphi 0, %s23
    %s26 = sphi 0, %s24
    %s38 = sphi 0, %s40
    %s41 = sphi 0, %s38
    %s42 = sphi 0, %s41
    %s58 = sphi 0, %s42
    %s64 = sphi 0, %s66
    %s67 = sphi 0, %s64
    %s68 = sphi 0, %s67
    %s84 = sphi 0, %s68
    %s90 = sphi 0, %s92
    %s93 = sphi 0, %s90
    %s94 = sphi 0, %s93
    %s110 = sphi 0, %s94
    %s114 = sphi 0, %s114
    %s116 = sphi 0, %s114
    %s117 = sphi 0, %s116
    %s131 = sphi 0, %s117
    %s135 = sphi 0, %s135
    %s137 = sphi 0, %s135
    %s138 = sphi 0, %s137
    %s152 = sphi 0, %s138
    %s156 = sphi 0, %s156
    %s158 = sphi 0, %s156
    %s159 = sphi 0, %s158
    %s173 = sphi 0, %s159
    %s181 = sphi 0, %s183
    %s184 = sphi 0, %s181
    %s185 = sphi 0, %s184
    %s201 = sphi 0, %s185
    %s207 = sphi 0, %s209
    %s210 = sphi 0, %s207
    %s211 = sphi 0, %s210
    %s227 = sphi 0, %s211
  $region4: #{convlstm_forward_sequence.3} parent=0 // loop_header_branch
    %17 = sbr.rel (%p15) target = $region8
  $region5: #{convlstm_forward_sequence.3} parent=0 // loop_body
    %s19 = ssub.s32 %s14, 1
    %s20 = ssub.s32 %s14, 2
    %s27 = sadd.s32 1, %s22
    %p28 = scmp.ge.s32.totalorder %s27, 8
    %s29 = scalar_select %p28, 0, %s27
    %s30 = sadd.s32 1, %s21
    %s31 = scalar_select %p28, %s30, %s21
    %p32 = scmp.ge.s32.totalorder %s31, 2
    %s33 = scalar_select %p32, 0, %s31
    %s34 = ssub.s32 %s22, %s29
    %s35 = ssub.s32 %s21, %s33
    %s36 = sor.u32 %s34, %s35
    %p37 = scmp.eq.s32.totalorder %s36, 0
    %s39 = sadd.s32 %s38, 1
    %s40 = scalar_select %p37, %s38, %s39
    %p43 = pneg %p37
    %p44 = scmp.eq.s32.totalorder %s14, 15
    %p45 = por %p43, %p44
    %p46 = scmp.ne.s32.totalorder %s38, %s41
    %p47 = scmp.eq.s32.totalorder %s14, 0
    %p48 = por %p46, %p47
    %p49 = scmp.ne.s32.totalorder %s38, %s41
    %p50 = scmp.eq.s32.totalorder %s19, 15
    %p51 = por %p49, %p50
    %p52 = scmp.ne.s32.totalorder %s41, %s42
    %p53 = scmp.eq.s32.totalorder %s19, 0
    %p54 = por %p52, %p53
    %p55 = scmp.ne.s32.totalorder %s41, %s42
    %p56 = scmp.eq.s32.totalorder %s20, 15
    %p57 = por %p55, %p56
    %p59 = scmp.ne.s32.totalorder %s42, %s58
    %p60 = scmp.eq.s32.totalorder %s20, 0
    %p61 = por %p59, %p60
    %s62 = ssub.s32 %s21, %s33
    %p63 = scmp.eq.s32.totalorder %s62, 0
    %s65 = sadd.s32 %s64, 1
    %s66 = scalar_select %p63, %s64, %s65
    %p69 = pneg %p63
    %p70 = scmp.eq.s32.totalorder %s14, 15
    %p71 = por %p69, %p70
    %p72 = scmp.ne.s32.totalorder %s64, %s67
    %p73 = scmp.eq.s32.totalorder %s14, 0
    %p74 = por %p72, %p73
    %p75 = scmp.ne.s32.totalorder %s64, %s67
    %p76 = scmp.eq.s32.totalorder %s19, 15
    %p77 = por %p75, %p76
    %p78 = scmp.ne.s32.totalorder %s67, %s68
    %p79 = scmp.eq.s32.totalorder %s19, 0
    %p80 = por %p78, %p79
    %p81 = scmp.ne.s32.totalorder %s67, %s68
    %p82 = scmp.eq.s32.totalorder %s20, 15
    %p83 = por %p81, %p82
    %p85 = scmp.ne.s32.totalorder %s68, %s84
    %p86 = scmp.eq.s32.totalorder %s20, 0
    %p87 = por %p85, %p86
    %s88 = ssub.s32 %s21, %s33
    %p89 = scmp.eq.s32.totalorder %s88, 0
    %s91 = sadd.s32 %s90, 1
    %s92 = scalar_select %p89, %s90, %s91
    %p95 = pneg %p89
    %p96 = scmp.eq.s32.totalorder %s14, 15
    %p97 = por %p95, %p96
    %p98 = scmp.ne.s32.totalorder %s90, %s93
    %p99 = scmp.eq.s32.totalorder %s14, 0
    %p100 = por %p98, %p99
    %p101 = scmp.ne.s32.totalorder %s90, %s93
    %p102 = scmp.eq.s32.totalorder %s19, 15
    %p103 = por %p101, %p102
    %p104 = scmp.ne.s32.totalorder %s93, %s94
    %p105 = scmp.eq.s32.totalorder %s19, 0
    %p106 = por %p104, %p105
    %p107 = scmp.ne.s32.totalorder %s93, %s94
    %p108 = scmp.eq.s32.totalorder %s20, 15
    %p109 = por %p107, %p108
    %p111 = scmp.ne.s32.totalorder %s94, %s110
    %p112 = scmp.eq.s32.totalorder %s20, 0
    %p113 = por %p111, %p112
    %s115 = sadd.s32 %s114, 1
    %p118 = scmp.eq.s32.totalorder %s14, 15
    %p119 = scmp.ne.s32.totalorder %s114, %s116
    %p120 = scmp.eq.s32.totalorder %s14, 0
    %p121 = por %p119, %p120
    %p122 = scmp.ne.s32.totalorder %s114, %s116
    %p123 = scmp.eq.s32.totalorder %s19, 15
    %p124 = por %p122, %p123
    %p125 = scmp.ne.s32.totalorder %s116, %s117
    %p126 = scmp.eq.s32.totalorder %s19, 0
    %p127 = por %p125, %p126
    %p128 = scmp.ne.s32.totalorder %s116, %s117
    %p129 = scmp.eq.s32.totalorder %s20, 15
    %p130 = por %p128, %p129
    %p132 = scmp.ne.s32.totalorder %s117, %s131
    %p133 = scmp.eq.s32.totalorder %s20, 0
    %p134 = por %p132, %p133
    %s136 = sadd.s32 %s135, 1
    %p139 = scmp.eq.s32.totalorder %s14, 15
    %p140 = scmp.ne.s32.totalorder %s135, %s137
    %p141 = scmp.eq.s32.totalorder %s14, 0
    %p142 = por %p140, %p141
    %p143 = scmp.ne.s32.totalorder %s135, %s137
    %p144 = scmp.eq.s32.totalorder %s19, 15
    %p145 = por %p143, %p144
    %p146 = scmp.ne.s32.totalorder %s137, %s138
    %p147 = scmp.eq.s32.totalorder %s19, 0
    %p148 = por %p146, %p147
    %p149 = scmp.ne.s32.totalorder %s137, %s138
    %p150 = scmp.eq.s32.totalorder %s20, 15
    %p151 = por %p149, %p150
    %p153 = scmp.ne.s32.totalorder %s138, %s152
    %p154 = scmp.eq.s32.totalorder %s20, 0
    %p155 = por %p153, %p154
    %s157 = sadd.s32 %s156, 1
    %p160 = scmp.eq.s32.totalorder %s14, 15
    %p161 = scmp.ne.s32.totalorder %s156, %s158
    %p162 = scmp.eq.s32.totalorder %s14, 0
    %p163 = por %p161, %p162
    %p164 = scmp.ne.s32.totalorder %s156, %s158
    %p165 = scmp.eq.s32.totalorder %s19, 15
    %p166 = por %p164, %p165
    %p167 = scmp.ne.s32.totalorder %s158, %s159
    %p168 = scmp.eq.s32.totalorder %s19, 0
    %p169 = por %p167, %p168
    %p170 = scmp.ne.s32.totalorder %s158, %s159
    %p171 = scmp.eq.s32.totalorder %s20, 15
    %p172 = por %p170, %p171
    %p174 = scmp.ne.s32.totalorder %s159, %s173
    %p175 = scmp.eq.s32.totalorder %s20, 0
    %p176 = por %p174, %p175
    %s177 = ssub.s32 %s22, %s29
    %s178 = ssub.s32 %s21, %s33
    %s179 = sor.u32 %s177, %s178
    %p180 = scmp.eq.s32.totalorder %s179, 0
    %s182 = sadd.s32 %s181, 1
    %s183 = scalar_select %p180, %s181, %s182
    %p186 = pneg %p180
    %p187 = scmp.eq.s32.totalorder %s14, 15
    %p188 = por %p186, %p187
    %p189 = scmp.ne.s32.totalorder %s181, %s184
    %p190 = scmp.eq.s32.totalorder %s14, 0
    %p191 = por %p189, %p190
    %p192 = scmp.ne.s32.totalorder %s181, %s184
    %p193 = scmp.eq.s32.totalorder %s19, 15
    %p194 = por %p192, %p193
    %p195 = scmp.ne.s32.totalorder %s184, %s185
    %p196 = scmp.eq.s32.totalorder %s19, 0
    %p197 = por %p195, %p196
    %p198 = scmp.ne.s32.totalorder %s184, %s185
    %p199 = scmp.eq.s32.totalorder %s20, 15
    %p200 = por %p198, %p199
    %p202 = scmp.ne.s32.totalorder %s185, %s201
    %p203 = scmp.eq.s32.totalorder %s20, 0
    %p204 = por %p202, %p203
    %s205 = ssub.s32 %s21, %s33
    %p206 = scmp.eq.s32.totalorder %s205, 0
    %s208 = sadd.s32 %s207, 1
    %s209 = scalar_select %p206, %s207, %s208
    %p212 = pneg %p206
    %p213 = scmp.eq.s32.totalorder %s14, 15
    %p214 = por %p212, %p213
    %p215 = scmp.ne.s32.totalorder %s207, %s210
    %p216 = scmp.eq.s32.totalorder %s14, 0
    %p217 = por %p215, %p216
    %p218 = scmp.ne.s32.totalorder %s207, %s210
    %p219 = scmp.eq.s32.totalorder %s19, 15
    %p220 = por %p218, %p219
    %p221 = scmp.ne.s32.totalorder %s210, %s211
    %p222 = scmp.eq.s32.totalorder %s19, 0
    %p223 = por %p221, %p222
    %p224 = scmp.ne.s32.totalorder %s210, %s211
    %p225 = scmp.eq.s32.totalorder %s20, 15
    %p226 = por %p224, %p225
    %p228 = scmp.ne.s32.totalorder %s211, %s227
    %p229 = scmp.eq.s32.totalorder %s20, 0
    %p230 = por %p228, %p229
    %p231 = scmp.le.s32.totalorder 1, %s14
    %p232 = scmp.lt.s32.totalorder %s14, 17
    %p233 = pnand %p231, %p232
    %p234 = pneg %p233
    // Predicated region
    $region9: #{convlstm_forward_sequence.3} parent=5 // pred_check
      _
    $region10: #{convlstm_forward_sequence.3} parent=5 // pred_check_branch
      %236 = sbr.rel (%p233) target = $region12
    $region11: #{convlstm_forward_sequence.3} parent=5 // pred_region
      %s237 = ssub.s32 %s14, 1
      // Predicated region
      $region13: #{convlstm_forward_sequence.3} parent=11 // pred_check
        %p238 = pneg %p127
      $region14: #{convlstm_forward_sequence.3} parent=11 // pred_check_branch
        %240 = sbr.rel (%p238) target = $region16
      $region15: #{convlstm_forward_sequence.3} parent=11 // pred_region
        _
      $region16: #{convlstm_forward_sequence.3} parent=11 // pred_fallthru
        _
      // Predicated region
      $region17: #{convlstm_forward_sequence.3} parent=11 // pred_check
        %p241 = pneg %p148
      $region18: #{convlstm_forward_sequence.3} parent=11 // pred_check_branch
        %243 = sbr.rel (%p241) target = $region20
      $region19: #{convlstm_forward_sequence.3} parent=11 // pred_region
        _
      $region20: #{convlstm_forward_sequence.3} parent=11 // pred_fallthru
        _
      // Predicated region
      $region21: #{convlstm_forward_sequence.3} parent=11 // pred_check
        %p244 = pneg %p169
      $region22: #{convlstm_forward_sequence.3} parent=11 // pred_check_branch
        %246 = sbr.rel (%p244) target = $region24
      $region23: #{convlstm_forward_sequence.3} parent=11 // pred_region
        _
      $region24: #{convlstm_forward_sequence.3} parent=11 // pred_fallthru
        _
    $region12: #{convlstm_forward_sequence.3} parent=5 // pred_fallthru
      _
    %p247 = scmp.lt.s32.totalorder %s14, 16
    // Predicated region
    $region25: #{convlstm_forward_sequence.3} parent=5 // pred_check
      %p248 = pneg %p247
    $region26: #{convlstm_forward_sequence.3} parent=5 // pred_check_branch
      %250 = sbr.rel (%p248) target = $region28
    $region27: #{convlstm_forward_sequence.3} parent=5 // pred_region
      // Predicated region
      $region29: #{convlstm_forward_sequence.3} parent=27 // pred_check
        %p251 = pneg %p48
      $region30: #{convlstm_forward_sequence.3} parent=27 // pred_check_branch
        %253 = sbr.rel (%p251) target = $region32
      $region31: #{convlstm_forward_sequence.3} parent=27 // pred_region
        %p254 = scmp.lt.s32.totalorder %s22, 7
        %s255 = scalar_select %p254, %s22, 7
        %p256 = scmp.lt.s32.totalorder %s21, 1
        %s257 = scalar_select %p256, %s21, 1
        %s258 = smul.addr %s257, 18
        %s259 = smul.addr %s255, 36
        %s260 = sadd.s32 %s258, %s259
        %s261 = smul.addr %s260, 4
        %s262 = scalar_lea.vmem %s0, %s261
      $region32: #{convlstm_forward_sequence.3} parent=27 // pred_fallthru
        _
      // Predicated region
      $region33: #{convlstm_forward_sequence.3} parent=27 // pred_check
        %p263 = pneg %p74
      $region34: #{convlstm_forward_sequence.3} parent=27 // pred_check_branch
        %265 = sbr.rel (%p263) target = $region36
      $region35: #{convlstm_forward_sequence.3} parent=27 // pred_region
        %p266 = scmp.lt.s32.totalorder %s21, 1
        %s267 = scalar_select %p266, %s21, 1
        %s268 = smul.addr %s267, 4
        %s269 = smul.addr %s268, 8
        %s270 = scalar_lea.vmem %s1, %s269
      $region36: #{convlstm_forward_sequence.3} parent=27 // pred_fallthru
        _
      // Predicated region
      $region37: #{convlstm_forward_sequence.3} parent=27 // pred_check
        %p271 = pneg %p100
      $region38: #{convlstm_forward_sequence.3} parent=27 // pred_check_branch
        %273 = sbr.rel (%p271) target = $region40
      $region39: #{convlstm_forward_sequence.3} parent=27 // pred_region
        %p274 = scmp.lt.s32.totalorder %s21, 1
        %s275 = scalar_select %p274, %s21, 1
        %s276 = smul.addr %s275, 4
        %s277 = smul.addr %s276, 8
        %s278 = scalar_lea.vmem %s2, %s277
      $region40: #{convlstm_forward_sequence.3} parent=27 // pred_fallthru
        _
    $region28: #{convlstm_forward_sequence.3} parent=5 // pred_fallthru
      _
    %p279 = scmp.le.s32.totalorder 1, %s14
    %p280 = scmp.lt.s32.totalorder %s14, 17
    %p281 = pnand %p279, %p280
    %p282 = pneg %p281
    // Predicated region
    $region41: #{convlstm_forward_sequence.3} parent=5 // pred_check
      _
    $region42: #{convlstm_forward_sequence.3} parent=5 // pred_check_branch
      %284 = sbr.rel (%p281) target = $region44
    $region43: #{convlstm_forward_sequence.3} parent=5 // pred_region
      %s285 = ssub.s32 %s14, 1
      %p286 = scmp.lt.s32.totalorder %s24, 7
      %s287 = scalar_select %p286, %s24, 7
      %p288 = scmp.lt.s32.totalorder %s23, 1
      %s289 = scalar_select %p288, %s23, 1
      %s290 = smul.addr %s289, 18
      %s291 = smul.addr %s287, 36
      %s292 = sadd.s32 %s290, %s291
      %s293 = smul.addr %s292, 4
      %s294 = scalar_lea.vmem %s0, %s293
      %p295 = pneg %p54
      %p296 = pneg %p51
      %p297 = scmp.lt.s32.totalorder %s23, 1
      %s298 = scalar_select %p297, %s23, 1
      %s299 = smul.addr %s298, 4
      %s300 = smul.addr %s299, 8
      %s301 = scalar_lea.vmem %s1, %s300
      %p302 = pneg %p80
      %p303 = pneg %p77
      %p304 = scmp.lt.s32.totalorder %s23, 1
      %s305 = scalar_select %p304, %s23, 1
      %s306 = smul.addr %s305, 4
      %s307 = smul.addr %s306, 8
      %s308 = scalar_lea.vmem %s2, %s307
      %p309 = pneg %p106
      %p310 = pneg %p103
      %p311 = pneg %p127
      %p312 = pneg %p124
      %p313 = pneg %p148
      %p314 = pneg %p145
      %p315 = pneg %p169
      %p316 = pneg %p166
      %p317 = pneg %p197
      %p318 = pneg %p194
      %p319 = scmp.lt.s32.totalorder %s24, 7
      %s320 = scalar_select %p319, %s24, 7
      %p321 = scmp.lt.s32.totalorder %s23, 1
      %s322 = scalar_select %p321, %s23, 1
      %s323 = smul.addr %s322, 4
      %s324 = smul.addr %s320, 8
      %s325 = sadd.s32 %s323, %s324
      %s326 = smul.addr %s325, 8
      %s327 = scalar_lea.vmem %s6, %s326
      %p328 = pneg %p223
      %p329 = pneg %p220
      %p330 = scmp.lt.s32.totalorder %s23, 1
      %s331 = scalar_select %p330, %s23, 1
      %s332 = smul.addr %s331, 4
      %s333 = smul.addr %s332, 8
      %s334 = scalar_lea.vmem %s7, %s333
      %p335 = scmp.lt.s32.totalorder %s24, 7
      %s336 = scalar_select %p335, %s24, 7
      %p337 = scmp.lt.s32.totalorder %s23, 1
      %s338 = scalar_select %p337, %s23, 1
      %s339 = smul.addr %s338, 18
      %s340 = smul.addr %s336, 36
      %s341 = sadd.s32 %s339, %s340
      %s342 = smul.addr %s341, 4
      %s343 = scalar_lea.vmem %s0, %s342
      %p344 = scmp.lt.s32.totalorder %s23, 1
      %s345 = scalar_select %p344, %s23, 1
      %s346 = smul.addr %s345, 4
      %s347 = smul.addr %s346, 8
      %s348 = scalar_lea.vmem %s1, %s347
      %p349 = scmp.lt.s32.totalorder %s23, 1
      %s350 = scalar_select %p349, %s23, 1
      %s351 = smul.addr %s350, 4
      %s352 = smul.addr %s351, 8
      %s353 = scalar_lea.vmem %s2, %s352
      %p354 = scmp.lt.s32.totalorder %s24, 7
      %s355 = scalar_select %p354, %s24, 7
      %p356 = scmp.lt.s32.totalorder %s23, 1
      %s357 = scalar_select %p356, %s23, 1
      %s358 = smul.addr %s357, 4
      %s359 = smul.addr %s355, 8
      %s360 = sadd.s32 %s358, %s359
      %s361 = smul.addr %s360, 8
      %s362 = scalar_lea.vmem %s6, %s361
      %p363 = scmp.lt.s32.totalorder %s23, 1
      %s364 = scalar_select %p363, %s23, 1
      %s365 = smul.addr %s364, 4
      %s366 = smul.addr %s365, 8
      %s367 = scalar_lea.vmem %s7, %s366
      %p369 = scmp.eq.s32.totalorder %s24, 0
      // Predicated region
      $region45: #{convlstm_forward_sequence.3} parent=43 // pred_check
        %p370 = pneg %p369
      $region46: #{convlstm_forward_sequence.3} parent=43 // pred_check_branch
        %372 = sbr.rel (%p370) target = $region48
      $region47: #{convlstm_forward_sequence.3} parent=43 // pred_region
        %373 = vst [vmem:[#allocation2] sm:$0xff] 0.0
        %374 = vst [vmem:[#allocation2 + $0x8] sm:$0xff] 0.0
        %375 = vst [vmem:[#allocation2 + $0x10] sm:$0xff] 0.0
        %376 = vst [vmem:[#allocation2 + $0x18] sm:$0xff] 0.0
        %377 = vst [vmem:[#allocation2 + $0x20] sm:$0xff] 0.0
        %378 = vst [vmem:[#allocation2 + $0x28] sm:$0xff] 0.0
        %379 = vst [vmem:[#allocation2 + $0x30] sm:$0xff] 0.0
        %380 = vst [vmem:[#allocation2 + $0x38] sm:$0xff] 0.0
        %v381 = vld [vmem:[%s348] sm:$0xff]
        %v382 = vld [vmem:[%s348 + $0x8] sm:$0xff]
        %v383 = vld [vmem:[%s348 + $0x10] sm:$0xff]
        %v384 = vld [vmem:[%s348 + $0x18] sm:$0xff]
        %385 = vst [vmem:[#allocation2 + $0x8] sm:$0xff] %v381
        %386 = vst [vmem:[#allocation2 + $0x10] sm:$0xff] %v382
        %387 = vst [vmem:[#allocation2 + $0x28] sm:$0xff] %v383
        %388 = vst [vmem:[#allocation2 + $0x30] sm:$0xff] %v384
        %v389 = vld [vmem:[%s353] sm:$0xff]
        %v390 = vld [vmem:[%s353 + $0x8] sm:$0xff]
        %v391 = vld [vmem:[%s353 + $0x10] sm:$0xff]
        %v392 = vld [vmem:[%s353 + $0x18] sm:$0xff]
        %393 = vst [vmem:[#allocation3] sm:$0xff] %v389
        %394 = vst [vmem:[#allocation3 + $0x8] sm:$0xff] %v390
        %395 = vst [vmem:[#allocation3 + $0x10] sm:$0xff] %v391
        %396 = vst [vmem:[#allocation3 + $0x18] sm:$0xff] %v392
      $region48: #{convlstm_forward_sequence.3} parent=43 // pred_fallthru
        _
      %v397 = vld [vmem:[%s343] sm:$0xff]
      %v398 = vld [vmem:[%s343 + $0x8] sm:$0xff]
      %v399 = vld [vmem:[%s343 + $0x10] sm:$0xff]
      %v400 = vld [vmem:[%s343 + $0x18] sm:$0xff]
      %v401 = vld [vmem:[%s343 + $0x20] sm:$0xff]
      %v402 = vld [vmem:[%s343 + $0x28] sm:$0xff]
      %v403 = vld [vmem:[%s343 + $0x30] sm:$0xff]
      %v404 = vld [vmem:[%s343 + $0x38] sm:$0xff]
      %v405 = vld [vmem:[%s343 + $0x40] sm:$0xff]
      %v406 = vunpack.c.l.bf16 %v397
      %v407 = vunpack.c.h.bf16 %v397
      %v408 = vunpack.c.l.bf16 %v398
      %v409 = vunpack.c.h.bf16 %v398
      %v410 = vunpack.c.l.bf16 %v399
      %v411 = vunpack.c.h.bf16 %v399
      %v412 = vunpack.c.l.bf16 %v400
      %v413 = vunpack.c.h.bf16 %v400
      %v414 = vunpack.c.l.bf16 %v401
      %v415 = vunpack.c.h.bf16 %v401
      %v416 = vunpack.c.l.bf16 %v402
      %v417 = vunpack.c.h.bf16 %v402
      %v418 = vunpack.c.l.bf16 %v403
      %v419 = vunpack.c.h.bf16 %v403
      %v420 = vunpack.c.l.bf16 %v404
      %v421 = vunpack.c.h.bf16 %v404
      %v422 = vunpack.c.l.bf16 %v405
      %v423 = vunpack.c.h.bf16 %v405
      %424 = vst [vmem:[#allocation4] sm:$0xff] %v406
      %425 = vst [vmem:[#allocation4 + $0x8] sm:$0xff] %v407
      %426 = vst [vmem:[#allocation4 + $0x10] sm:$0xff] %v408
      %427 = vst [vmem:[#allocation4 + $0x18] sm:$0xff] %v409
      %428 = vst [vmem:[#allocation4 + $0x20] sm:$0xff] %v410
      %429 = vst [vmem:[#allocation4 + $0x28] sm:$0xff] %v411
      %430 = vst [vmem:[#allocation4 + $0x30] sm:$0xff] %v412
      %431 = vst [vmem:[#allocation4 + $0x38] sm:$0xff] %v413
      %432 = vst [vmem:[#allocation4 + $0x40] sm:$0xff] %v414
      %433 = vst [vmem:[#allocation4 + $0x48] sm:$0xff] %v415
      %434 = vst [vmem:[#allocation4 + $0x50] sm:$0xff] %v416
      %435 = vst [vmem:[#allocation4 + $0x58] sm:$0xff] %v417
      %436 = vst [vmem:[#allocation4 + $0x60] sm:$0xff] %v418
      %437 = vst [vmem:[#allocation4 + $0x68] sm:$0xff] %v419
      %438 = vst [vmem:[#allocation4 + $0x70] sm:$0xff] %v420
      %439 = vst [vmem:[#allocation4 + $0x78] sm:$0xff] %v421
      %440 = vst [vmem:[#allocation4 + $0x80] sm:$0xff] %v422
      %441 = vst [vmem:[#allocation4 + $0x88] sm:$0xff] %v423
      %v442 = vld [vmem:[#allocation2] sm:$0xff]
      %v443 = vld [vmem:[#allocation2 + $0x8] sm:$0xff]
      %v444 = vld [vmem:[#allocation2 + $0x10] sm:$0xff]
      %v445 = vld [vmem:[#allocation2 + $0x18] sm:$0xff]
      %v446 = vld [vmem:[#allocation2 + $0x20] sm:$0xff]
      %v447 = vld [vmem:[#allocation2 + $0x28] sm:$0xff]
      %v448 = vld [vmem:[#allocation2 + $0x30] sm:$0xff]
      %v449 = vld [vmem:[#allocation2 + $0x38] sm:$0xff]
      %v450 = vld [vmem:[%s5] sm:$0x3]
      %v452 = vlaneseq
      %v453 = vshrl.u32 %v452, 7
      %v454 = vsub.s32 0, %v453
      %v455 = vrot.slane %v450, %v454
      %v456 = vlaneseq
      %v457 = vshrl.u32 %v456, 7
      %v458 = vsub.s32 1, %v457
      %v459 = vrot.slane %v450, %v458
      %460 = vrot.lane.b32.xlu0 %v455, 111
      %v461 = vpop.permute.xlu0 %460
      %462 = vrot.lane.b32.xlu0 %v459, 111
      %v463 = vpop.permute.xlu0 %462
      %vm464 = vcmask 908288
      %v465 = vsel %vm464, %v461, %v463
      %v469 = vmul.f32 %v442, %v461
      %v470 = vmul.f32 %v443, %v465
      %v471 = vmul.f32 %v444, %v463
      %v472 = vmul.f32 %v446, %v461
      %v473 = vmul.f32 %v447, %v465
      %v474 = vmul.f32 %v448, %v463
      %481 = vrot.lane.b32.xlu0 %v469, 17
      %v482 = vpop.permute.xlu0 %481
      %483 = vrot.lane.b32.xlu0 %v470, 17
      %v484 = vpop.permute.xlu0 %483
      %485 = vrot.lane.b32.xlu0 %v471, 17
      %v486 = vpop.permute.xlu0 %485
      %487 = vrot.lane.b32.xlu0 %v472, 17
      %v488 = vpop.permute.xlu0 %487
      %489 = vrot.lane.b32.xlu0 %v473, 17
      %v490 = vpop.permute.xlu0 %489
      %491 = vrot.lane.b32.xlu0 %v474, 17
      %v492 = vpop.permute.xlu0 %491
      %vm493 = vcmask 138240
      %v494 = vsel %vm493, %v482, %v484
      %v495 = vsel %vm493, %v484, %v486
      %v496 = vsel %vm493, %v488, %v490
      %v497 = vsel %vm493, %v490, %v492
      %502 = vst [vmem:[#allocation4 + $0x90] sm:$0xff] %v494
      %503 = vst [vmem:[#allocation4 + $0x98] sm:$0xff] %v495
      %504 = vst [vmem:[#allocation4 + $0xa0] sm:$0xff] %v496
      %505 = vst [vmem:[#allocation4 + $0xa8] sm:$0xff] %v497
      %s506 = scalar_lea.vmem %s5, 2
      %v507 = vld [vmem:[%s506] sm:$0x3]
      %v509 = vlaneseq
      %v510 = vshrl.u32 %v509, 7
      %v511 = vsub.s32 0, %v510
      %v512 = vrot.slane %v507, %v511
      %v513 = vlaneseq
      %v514 = vshrl.u32 %v513, 7
      %v515 = vsub.s32 1, %v514
      %v516 = vrot.slane %v507, %v515
      %517 = vrot.lane.b32.xlu0 %v512, 112
      %v518 = vpop.permute.xlu0 %517
      %519 = vrot.lane.b32.xlu0 %v516, 112
      %v520 = vpop.permute.xlu0 %519
      %vm521 = vcmask 916480
      %v522 = vsel %vm521, %v518, %v520
      %v526 = vmul.f32 %v442, %v518
      %v527 = vmul.f32 %v443, %v522
      %v528 = vmul.f32 %v444, %v520
      %v529 = vmul.f32 %v446, %v518
      %v530 = vmul.f32 %v447, %v522
      %v531 = vmul.f32 %v448, %v520
      %538 = vrot.lane.b32.xlu0 %v526, 16
      %v539 = vpop.permute.xlu0 %538
      %540 = vrot.lane.b32.xlu0 %v527, 16
      %v541 = vpop.permute.xlu0 %540
      %542 = vrot.lane.b32.xlu0 %v528, 16
      %v543 = vpop.permute.xlu0 %542
      %544 = vrot.lane.b32.xlu0 %v529, 16
      %v545 = vpop.permute.xlu0 %544
      %546 = vrot.lane.b32.xlu0 %v530, 16
      %v547 = vpop.permute.xlu0 %546
      %548 = vrot.lane.b32.xlu0 %v531, 16
      %v549 = vpop.permute.xlu0 %548
      %vm550 = vcmask 130048
      %v551 = vsel %vm550, %v539, %v541
      %v552 = vsel %vm550, %v541, %v543
      %v553 = vsel %vm550, %v545, %v547
      %v554 = vsel %vm550, %v547, %v549
      %559 = vst [vmem:[#allocation4 + $0xb0] sm:$0xff] %v551
      %560 = vst [vmem:[#allocation4 + $0xb8] sm:$0xff] %v552
      %561 = vst [vmem:[#allocation4 + $0xc0] sm:$0xff] %v553
      %562 = vst [vmem:[#allocation4 + $0xc8] sm:$0xff] %v554
      %s563 = scalar_lea.vmem %s5, 4
      %v564 = vld [vmem:[%s563] sm:$0x3]
      %v566 = vlaneseq
      %v567 = vshrl.u32 %v566, 7
      %v568 = vsub.s32 0, %v567
      %v569 = vrot.slane %v564, %v568
      %v570 = vlaneseq
      %v571 = vshrl.u32 %v570, 7
      %v572 = vsub.s32 1, %v571
      %v573 = vrot.slane %v564, %v572
      %574 = vrot.lane.b32.xlu0 %v569, 113
      %v575 = vpop.permute.xlu0 %574
      %576 = vrot.lane.b32.xlu0 %v573, 113
      %v577 = vpop.permute.xlu0 %576
      %vm578 = vcmask 924672
      %v579 = vsel %vm578, %v575, %v577
      %v583 = vmul.f32 %v442, %v575
      %v584 = vmul.f32 %v443, %v579
      %v585 = vmul.f32 %v444, %v577
      %v586 = vmul.f32 %v446, %v575
      %v587 = vmul.f32 %v447, %v579
      %v588 = vmul.f32 %v448, %v577
      %595 = vrot.lane.b32.xlu0 %v583, 15
      %v596 = vpop.permute.xlu0 %595
      %597 = vrot.lane.b32.xlu0 %v584, 15
      %v598 = vpop.permute.xlu0 %597
      %599 = vrot.lane.b32.xlu0 %v585, 15
      %v600 = vpop.permute.xlu0 %599
      %601 = vrot.lane.b32.xlu0 %v586, 15
      %v602 = vpop.permute.xlu0 %601
      %603 = vrot.lane.b32.xlu0 %v587, 15
      %v604 = vpop.permute.xlu0 %603
      %605 = vrot.lane.b32.xlu0 %v588, 15
      %v606 = vpop.permute.xlu0 %605
      %vm607 = vcmask 121856
      %v608 = vsel %vm607, %v596, %v598
      %v609 = vsel %vm607, %v598, %v600
      %v610 = vsel %vm607, %v602, %v604
      %v611 = vsel %vm607, %v604, %v606
      %616 = vst [vmem:[#allocation4 + $0xd0] sm:$0xff] %v608
      %617 = vst [vmem:[#allocation4 + $0xd8] sm:$0xff] %v609
      %618 = vst [vmem:[#allocation4 + $0xe0] sm:$0xff] %v610
      %619 = vst [vmem:[#allocation4 + $0xe8] sm:$0xff] %v611
      %s620 = scalar_lea.vmem %s5, 6
      %v621 = vld [vmem:[%s620] sm:$0x3]
      %v623 = vlaneseq
      %v624 = vshrl.u32 %v623, 7
      %v625 = vsub.s32 0, %v624
      %v626 = vrot.slane %v621, %v625
      %v627 = vlaneseq
      %v628 = vshrl.u32 %v627, 7
      %v629 = vsub.s32 1, %v628
      %v630 = vrot.slane %v621, %v629
      %631 = vrot.lane.b32.xlu0 %v626, 127
      %v632 = vpop.permute.xlu0 %631
      %633 = vrot.lane.b32.xlu0 %v630, 127
      %v634 = vpop.permute.xlu0 %633
      %vm635 = vcmask 1039360
      %v636 = vsel %vm635, %v632, %v634
      %v640 = vmul.f32 %v442, %v632
      %v641 = vmul.f32 %v443, %v636
      %v642 = vmul.f32 %v444, %v634
      %v643 = vmul.f32 %v446, %v632
      %v644 = vmul.f32 %v447, %v636
      %v645 = vmul.f32 %v448, %v634
      %652 = vrot.lane.b32.xlu0 %v640, 1
      %v653 = vpop.permute.xlu0 %652
      %654 = vrot.lane.b32.xlu0 %v641, 1
      %v655 = vpop.permute.xlu0 %654
      %656 = vrot.lane.b32.xlu0 %v642, 1
      %v657 = vpop.permute.xlu0 %656
      %658 = vrot.lane.b32.xlu0 %v643, 1
      %v659 = vpop.permute.xlu0 %658
      %660 = vrot.lane.b32.xlu0 %v644, 1
      %v661 = vpop.permute.xlu0 %660
      %662 = vrot.lane.b32.xlu0 %v645, 1
      %v663 = vpop.permute.xlu0 %662
      %vm664 = vcmask 7168
      %v665 = vsel %vm664, %v653, %v655
      %v666 = vsel %vm664, %v655, %v657
      %v667 = vsel %vm664, %v659, %v661
      %v668 = vsel %vm664, %v661, %v663
      %673 = vst [vmem:[#allocation4 + $0xf0] sm:$0xff] %v665
      %674 = vst [vmem:[#allocation4 + $0xf8] sm:$0xff] %v666
      %675 = vst [vmem:[#allocation4 + $0x100] sm:$0xff] %v667
      %676 = vst [vmem:[#allocation4 + $0x108] sm:$0xff] %v668
      %s677 = scalar_lea.vmem %s5, 8
      %v678 = vld [vmem:[%s677] sm:$0x3]
      %v680 = vlaneseq
      %v681 = vshrl.u32 %v680, 7
      %v682 = vsub.s32 0, %v681
      %v683 = vrot.slane %v678, %v682
      %v684 = vlaneseq
      %v685 = vshrl.u32 %v684, 7
      %v686 = vsub.s32 1, %v685
      %v687 = vrot.slane %v678, %v686
      %v690 = vmul.f32 %v443, %v683
      %v691 = vmul.f32 %v444, %v687
      %v692 = vmul.f32 %v447, %v683
      %v693 = vmul.f32 %v448, %v687
      %694 = vst [vmem:[#allocation4 + $0x110] sm:$0xff] %v690
      %695 = vst [vmem:[#allocation4 + $0x118] sm:$0xff] %v691
      %696 = vst [vmem:[#allocation4 + $0x120] sm:$0xff] %v692
      %697 = vst [vmem:[#allocation4 + $0x128] sm:$0xff] %v693
      %s698 = scalar_lea.vmem %s5, 10
      %v699 = vld [vmem:[%s698] sm:$0x3]
      %v701 = vlaneseq
      %v702 = vshrl.u32 %v701, 7
      %v703 = vsub.s32 0, %v702
      %v704 = vrot.slane %v699, %v703
      %v705 = vlaneseq
      %v706 = vshrl.u32 %v705, 7
      %v707 = vsub.s32 1, %v706
      %v708 = vrot.slane %v699, %v707
      %709 = vrot.lane.b32.xlu0 %v704, 1
      %v710 = vpop.permute.xlu0 %709
      %711 = vrot.lane.b32.xlu0 %v708, 1
      %v712 = vpop.permute.xlu0 %711
      %v713 = vsel %vm664, %v710, %v712
      %v717 = vmul.f32 %v443, %v710
      %v718 = vmul.f32 %v444, %v713
      %v719 = vmul.f32 %v445, %v712
      %v720 = vmul.f32 %v447, %v710
      %v721 = vmul.f32 %v448, %v713
      %v722 = vmul.f32 %v449, %v712
      %729 = vrot.lane.b32.xlu0 %v717, 127
      %v730 = vpop.permute.xlu0 %729
      %731 = vrot.lane.b32.xlu0 %v718, 127
      %v732 = vpop.permute.xlu0 %731
      %733 = vrot.lane.b32.xlu0 %v719, 127
      %v734 = vpop.permute.xlu0 %733
      %735 = vrot.lane.b32.xlu0 %v720, 127
      %v736 = vpop.permute.xlu0 %735
      %737 = vrot.lane.b32.xlu0 %v721, 127
      %v738 = vpop.permute.xlu0 %737
      %739 = vrot.lane.b32.xlu0 %v722, 127
      %v740 = vpop.permute.xlu0 %739
      %v741 = vsel %vm635, %v730, %v732
      %v742 = vsel %vm635, %v732, %v734
      %v743 = vsel %vm635, %v736, %v738
      %v744 = vsel %vm635, %v738, %v740
      %749 = vst [vmem:[#allocation4 + $0x130] sm:$0xff] %v741
      %750 = vst [vmem:[#allocation4 + $0x138] sm:$0xff] %v742
      %751 = vst [vmem:[#allocation4 + $0x140] sm:$0xff] %v743
      %752 = vst [vmem:[#allocation4 + $0x148] sm:$0xff] %v744
      %s753 = scalar_lea.vmem %s5, 12
      %v754 = vld [vmem:[%s753] sm:$0x3]
      %v756 = vlaneseq
      %v757 = vshrl.u32 %v756, 7
      %v758 = vsub.s32 0, %v757
      %v759 = vrot.slane %v754, %v758
      %v760 = vlaneseq
      %v761 = vshrl.u32 %v760, 7
      %v762 = vsub.s32 1, %v761
      %v763 = vrot.slane %v754, %v762
      %764 = vrot.lane.b32.xlu0 %v759, 15
      %v765 = vpop.permute.xlu0 %764
      %766 = vrot.lane.b32.xlu0 %v763, 15
      %v767 = vpop.permute.xlu0 %766
      %v768 = vsel %vm607, %v765, %v767
      %v772 = vmul.f32 %v443, %v765
      %v773 = vmul.f32 %v444, %v768
      %v774 = vmul.f32 %v445, %v767
      %v775 = vmul.f32 %v447, %v765
      %v776 = vmul.f32 %v448, %v768
      %v777 = vmul.f32 %v449, %v767
      %784 = vrot.lane.b32.xlu0 %v772, 113
      %v785 = vpop.permute.xlu0 %784
      %786 = vrot.lane.b32.xlu0 %v773, 113
      %v787 = vpop.permute.xlu0 %786
      %788 = vrot.lane.b32.xlu0 %v774, 113
      %v789 = vpop.permute.xlu0 %788
      %790 = vrot.lane.b32.xlu0 %v775, 113
      %v791 = vpop.permute.xlu0 %790
      %792 = vrot.lane.b32.xlu0 %v776, 113
      %v793 = vpop.permute.xlu0 %792
      %794 = vrot.lane.b32.xlu0 %v777, 113
      %v795 = vpop.permute.xlu0 %794
      %v796 = vsel %vm578, %v785, %v787
      %v797 = vsel %vm578, %v787, %v789
      %v798 = vsel %vm578, %v791, %v793
      %v799 = vsel %vm578, %v793, %v795
      %804 = vst [vmem:[#allocation4 + $0x150] sm:$0xff] %v796
      %805 = vst [vmem:[#allocation4 + $0x158] sm:$0xff] %v797
      %806 = vst [vmem:[#allocation4 + $0x160] sm:$0xff] %v798
      %807 = vst [vmem:[#allocation4 + $0x168] sm:$0xff] %v799
      %s808 = scalar_lea.vmem %s5, 14
      %v809 = vld [vmem:[%s808] sm:$0x3]
      %v811 = vlaneseq
      %v812 = vshrl.u32 %v811, 7
      %v813 = vsub.s32 0, %v812
      %v814 = vrot.slane %v809, %v813
      %v815 = vlaneseq
      %v816 = vshrl.u32 %v815, 7
      %v817 = vsub.s32 1, %v816
      %v818 = vrot.slane %v809, %v817
      %819 = vrot.lane.b32.xlu0 %v814, 16
      %v820 = vpop.permute.xlu0 %819
      %821 = vrot.lane.b32.xlu0 %v818, 16
      %v822 = vpop.permute.xlu0 %821
      %v823 = vsel %vm550, %v820, %v822
      %v827 = vmul.f32 %v443, %v820
      %v828 = vmul.f32 %v444, %v823
      %v829 = vmul.f32 %v445, %v822
      %v830 = vmul.f32 %v447, %v820
      %v831 = vmul.f32 %v448, %v823
      %v832 = vmul.f32 %v449, %v822
      %839 = vrot.lane.b32.xlu0 %v827, 112
      %v840 = vpop.permute.xlu0 %839
      %841 = vrot.lane.b32.xlu0 %v828, 112
      %v842 = vpop.permute.xlu0 %841
      %843 = vrot.lane.b32.xlu0 %v829, 112
      %v844 = vpop.permute.xlu0 %843
      %845 = vrot.lane.b32.xlu0 %v830, 112
      %v846 = vpop.permute.xlu0 %845
      %847 = vrot.lane.b32.xlu0 %v831, 112
      %v848 = vpop.permute.xlu0 %847
      %849 = vrot.lane.b32.xlu0 %v832, 112
      %v850 = vpop.permute.xlu0 %849
      %v851 = vsel %vm521, %v840, %v842
      %v852 = vsel %vm521, %v842, %v844
      %v853 = vsel %vm521, %v846, %v848
      %v854 = vsel %vm521, %v848, %v850
      %859 = vst [vmem:[#allocation4 + $0x170] sm:$0xff] %v851
      %860 = vst [vmem:[#allocation4 + $0x178] sm:$0xff] %v852
      %861 = vst [vmem:[#allocation4 + $0x180] sm:$0xff] %v853
      %862 = vst [vmem:[#allocation4 + $0x188] sm:$0xff] %v854
      %s863 = scalar_lea.vmem %s5, 16
      %v864 = vld [vmem:[%s863] sm:$0x3]
      %v866 = vlaneseq
      %v867 = vshrl.u32 %v866, 7
      %v868 = vsub.s32 0, %v867
      %v869 = vrot.slane %v864, %v868
      %v870 = vlaneseq
      %v871 = vshrl.u32 %v870, 7
      %v872 = vsub.s32 1, %v871
      %v873 = vrot.slane %v864, %v872
      %874 = vrot.lane.b32.xlu0 %v869, 17
      %v875 = vpop.permute.xlu0 %874
      %876 = vrot.lane.b32.xlu0 %v873, 17
      %v877 = vpop.permute.xlu0 %876
      %v878 = vsel %vm493, %v875, %v877
      %v882 = vmul.f32 %v443, %v875
      %v883 = vmul.f32 %v444, %v878
      %v884 = vmul.f32 %v445, %v877
      %v885 = vmul.f32 %v447, %v875
      %v886 = vmul.f32 %v448, %v878
      %v887 = vmul.f32 %v449, %v877
      %894 = vrot.lane.b32.xlu0 %v882, 111
      %v895 = vpop.permute.xlu0 %894
      %896 = vrot.lane.b32.xlu0 %v883, 111
      %v897 = vpop.permute.xlu0 %896
      %898 = vrot.lane.b32.xlu0 %v884, 111
      %v899 = vpop.permute.xlu0 %898
      %900 = vrot.lane.b32.xlu0 %v885, 111
      %v901 = vpop.permute.xlu0 %900
      %902 = vrot.lane.b32.xlu0 %v886, 111
      %v903 = vpop.permute.xlu0 %902
      %904 = vrot.lane.b32.xlu0 %v887, 111
      %v905 = vpop.permute.xlu0 %904
      %v906 = vsel %vm464, %v895, %v897
      %v907 = vsel %vm464, %v897, %v899
      %v908 = vsel %vm464, %v901, %v903
      %v909 = vsel %vm464, %v903, %v905
      %914 = vst [vmem:[#allocation4 + $0x190] sm:$0xff] %v906
      %915 = vst [vmem:[#allocation4 + $0x198] sm:$0xff] %v907
      %916 = vst [vmem:[#allocation4 + $0x1a0] sm:$0xff] %v908
      %917 = vst [vmem:[#allocation4 + $0x1a8] sm:$0xff] %v909
      %v918 = vld [vmem:[%s3] sm:$0xff]
      %v919 = vld [vmem:[%s3 + $0x8] sm:$0xff]
      %v920 = vld [vmem:[%s3 + $0x10] sm:$0xff]
      %v921 = vld [vmem:[%s3 + $0x18] sm:$0xff]
      %v922 = vld [vmem:[%s3 + $0x20] sm:$0xff]
      %v923 = vld [vmem:[%s3 + $0x28] sm:$0xff]
      %v924 = vld [vmem:[%s3 + $0x30] sm:$0xff]
      %v925 = vld [vmem:[%s3 + $0x38] sm:$0xff]
      %v926 = vld [vmem:[#allocation4] sm:$0xff]
      %v927 = vld [vmem:[#allocation4 + $0x8] sm:$0xff]
      %v928 = vld [vmem:[#allocation4 + $0x10] sm:$0xff]
      %v929 = vld [vmem:[#allocation4 + $0x18] sm:$0xff]
      %v930 = vld [vmem:[#allocation4 + $0x20] sm:$0xff]
      %v931 = vld [vmem:[#allocation4 + $0x28] sm:$0xff]
      %v932 = vld [vmem:[#allocation4 + $0x30] sm:$0xff]
      %v933 = vld [vmem:[#allocation4 + $0x38] sm:$0xff]
      %v934 = vld [vmem:[#allocation4 + $0x40] sm:$0xff]
      %v935 = vld [vmem:[#allocation4 + $0x48] sm:$0xff]
      %v936 = vld [vmem:[#allocation4 + $0x50] sm:$0xff]
      %v937 = vld [vmem:[#allocation4 + $0x58] sm:$0xff]
      %v938 = vld [vmem:[#allocation4 + $0x60] sm:$0xff]
      %v939 = vld [vmem:[#allocation4 + $0x68] sm:$0xff]
      %v940 = vld [vmem:[#allocation4 + $0x70] sm:$0xff]
      %v941 = vld [vmem:[#allocation4 + $0x78] sm:$0xff]
      %v942 = vld [vmem:[#allocation4 + $0x80] sm:$0xff]
      %v943 = vld [vmem:[#allocation4 + $0x88] sm:$0xff]
      %v944 = vld [vmem:[#allocation4 + $0x90] sm:$0xff]
      %v945 = vld [vmem:[#allocation4 + $0x98] sm:$0xff]
      %v946 = vld [vmem:[#allocation4 + $0xa0] sm:$0xff]
      %v947 = vld [vmem:[#allocation4 + $0xa8] sm:$0xff]
      %v948 = vld [vmem:[#allocation4 + $0xb0] sm:$0xff]
      %v949 = vld [vmem:[#allocation4 + $0xb8] sm:$0xff]
      %v950 = vld [vmem:[#allocation4 + $0xc0] sm:$0xff]
      %v951 = vld [vmem:[#allocation4 + $0xc8] sm:$0xff]
      %v952 = vld [vmem:[#allocation4 + $0xd0] sm:$0xff]
      %v953 = vld [vmem:[#allocation4 + $0xd8] sm:$0xff]
      %v954 = vld [vmem:[#allocation4 + $0xe0] sm:$0xff]
      %v955 = vld [vmem:[#allocation4 + $0xe8] sm:$0xff]
      %v956 = vld [vmem:[#allocation4 + $0xf0] sm:$0xff]
      %v957 = vld [vmem:[#allocation4 + $0xf8] sm:$0xff]
      %v958 = vld [vmem:[#allocation4 + $0x100] sm:$0xff]
      %v959 = vld [vmem:[#allocation4 + $0x108] sm:$0xff]
      %v960 = vld [vmem:[#allocation4 + $0x110] sm:$0xff]
      %v961 = vld [vmem:[#allocation4 + $0x118] sm:$0xff]
      %v962 = vld [vmem:[#allocation4 + $0x120] sm:$0xff]
      %v963 = vld [vmem:[#allocation4 + $0x128] sm:$0xff]
      %v964 = vld [vmem:[#allocation4 + $0x130] sm:$0xff]
      %v965 = vld [vmem:[#allocation4 + $0x138] sm:$0xff]
      %v966 = vld [vmem:[#allocation4 + $0x140] sm:$0xff]
      %v967 = vld [vmem:[#allocation4 + $0x148] sm:$0xff]
      %v968 = vld [vmem:[#allocation4 + $0x150] sm:$0xff]
      %v969 = vld [vmem:[#allocation4 + $0x158] sm:$0xff]
      %v970 = vld [vmem:[#allocation4 + $0x160] sm:$0xff]
      %v971 = vld [vmem:[#allocation4 + $0x168] sm:$0xff]
      %v972 = vld [vmem:[#allocation4 + $0x170] sm:$0xff]
      %v973 = vld [vmem:[#allocation4 + $0x178] sm:$0xff]
      %v974 = vld [vmem:[#allocation4 + $0x180] sm:$0xff]
      %v975 = vld [vmem:[#allocation4 + $0x188] sm:$0xff]
      %v976 = vld [vmem:[#allocation4 + $0x190] sm:$0xff]
      %v977 = vld [vmem:[#allocation4 + $0x198] sm:$0xff]
      %v978 = vld [vmem:[#allocation4 + $0x1a0] sm:$0xff]
      %v979 = vld [vmem:[#allocation4 + $0x1a8] sm:$0xff]
      %v980 = vpack.c.bf16 %v928, %v926
      %v981 = vpack.c.bf16 %v929, %v927
      %v982 = vpack.c.bf16 %v932, %v930
      %v983 = vpack.c.bf16 %v933, %v931
      %v984 = vpack.c.bf16 %v936, %v934
      %v985 = vpack.c.bf16 %v937, %v935
      %v986 = vpack.c.bf16 %v940, %v938
      %v987 = vpack.c.bf16 %v941, %v939
      %v988 = vpack.c.bf16 %v944, %v942
      %v989 = vpack.c.bf16 %v945, %v943
      %v990 = vpack.c.bf16 %v948, %v946
      %v991 = vpack.c.bf16 %v949, %v947
      %v992 = vpack.c.bf16 %v952, %v950
      %v993 = vpack.c.bf16 %v953, %v951
      %v994 = vpack.c.bf16 %v956, %v954
      %v995 = vpack.c.bf16 %v957, %v955
      %v996 = vpack.c.bf16 %v960, %v958
      %v997 = vpack.c.bf16 %v961, %v959
      %v998 = vpack.c.bf16 %v964, %v962
      %v999 = vpack.c.bf16 %v965, %v963
      %v1000 = vpack.c.bf16 %v968, %v966
      %v1001 = vpack.c.bf16 %v969, %v967
      %v1002 = vpack.c.bf16 %v972, %v970
      %v1003 = vpack.c.bf16 %v973, %v971
      %v1004 = vpack.c.bf16 %v976, %v974
      %v1005 = vpack.c.bf16 %v977, %v975
      %v1006 = vpack.c.bf16 %v978, %v978
      %v1007 = vpack.c.bf16 %v979, %v979
      %v1008 = vld [vmem:[%s4] sm:$0xff]
      %v1009 = vld [vmem:[%s4 + $0x8] sm:$0xff]
      %v1010 = vld [vmem:[%s4 + $0x10] sm:$0xff]
      %v1011 = vld [vmem:[%s4 + $0x18] sm:$0xff]
      %v1012 = vld [vmem:[%s4 + $0x20] sm:$0xff]
      %v1013 = vld [vmem:[%s4 + $0x28] sm:$0xff]
      %v1014 = vld [vmem:[%s4 + $0x30] sm:$0xff]
      %v1015 = vld [vmem:[%s4 + $0x38] sm:$0xff]
      %1017 = vset.pattern.permute.xlu0 0
      %1018 = vperm.xlu0 %1017, %v1008
      %v1019 = vpop.permute.xlu0 %1018
      %1022 = vset.pattern.permute.xlu0 0
      %1023 = vperm.xlu0 %1022, %v1009
      %v1024 = vpop.permute.xlu0 %1023
      %1027 = vset.pattern.permute.xlu0 0
      %1028 = vperm.xlu0 %1027, %v1010
      %v1029 = vpop.permute.xlu0 %1028
      %1032 = vset.pattern.permute.xlu0 0
      %1033 = vperm.xlu0 %1032, %v1011
      %v1034 = vpop.permute.xlu0 %1033
      %1037 = vset.pattern.permute.xlu0 0
      %1038 = vperm.xlu0 %1037, %v1012
      %v1039 = vpop.permute.xlu0 %1038
      %1042 = vset.pattern.permute.xlu0 0
      %1043 = vperm.xlu0 %1042, %v1013
      %v1044 = vpop.permute.xlu0 %1043
      %1047 = vset.pattern.permute.xlu0 0
      %1048 = vperm.xlu0 %1047, %v1014
      %v1049 = vpop.permute.xlu0 %1048
      %1052 = vset.pattern.permute.xlu0 0
      %1053 = vperm.xlu0 %1052, %v1015
      %v1054 = vpop.permute.xlu0 %1053
      %v1064 = vunpack.c.l.b16 %v918
      %v1065 = vunpack.c.h.b16 %v918
      %v1066 = vunpack.c.l.b16 %v919
      %v1067 = vunpack.c.h.b16 %v919
      %v1068 = vunpack.c.l.b16 %v920
      %v1069 = vunpack.c.h.b16 %v920
      %v1070 = vunpack.c.l.b16 %v921
      %v1071 = vunpack.c.h.b16 %v921
      %v1072 = vunpack.c.l.b16 %v922
      %v1073 = vunpack.c.h.b16 %v922
      %v1074 = vunpack.c.l.b16 %v923
      %v1075 = vunpack.c.h.b16 %v923
      %v1076 = vunpack.c.l.b16 %v924
      %v1077 = vunpack.c.h.b16 %v924
      %v1078 = vunpack.c.l.b16 %v925
      %v1079 = vunpack.c.h.b16 %v925
      %v1080 = vpack.c.b16 %v1066, %v1064
      %v1081 = vpack.c.b16 %v1067, %v1065
      %v1082 = vpack.c.b16 %v1070, %v1068
      %v1083 = vpack.c.b16 %v1071, %v1069
      %v1084 = vpack.c.b16 %v1074, %v1072
      %v1085 = vpack.c.b16 %v1075, %v1073
      %v1086 = vpack.c.b16 %v1078, %v1076
      %v1087 = vpack.c.b16 %v1079, %v1077
      %vm1092 = vcmask 719872
      %v1094 = vsel %vm1092, %v1081, 0
      %v1097 = vsel %vm1092, %v1083, 0
      %v1100 = vsel %vm1092, %v1085, 0
      %v1103 = vsel %vm1092, %v1087, 0
      %vm1105 = vcmask 1043456
      %v1107 = vsel %vm1105, %v1006, 0
      %v1110 = vsel %vm1105, %v1007, 0
      %1112 = vmatprep.subr.bf16.mxu0 %v995
      %1113 = vmatpush1.bf16.msra.mxu0 %v994
      %1114 = vmatprep.subr.bf16.mxu0 %v993
      %1115 = vmatpush1.bf16.msra.mxu0 %v992
      %1116 = vmatprep.subr.bf16.mxu0 %v991
      %1117 = vmatpush1.bf16.msra.mxu0 %v990
      %1118 = vmatprep.subr.bf16.mxu0 %v989
      %1119 = vmatpush1.bf16.msra.mxu0 %v988
      %1120 = vmatprep.subr.bf16.mxu0 %v987
      %1121 = vmatpush1.bf16.msra.mxu0 %v986
      %1122 = vmatprep.subr.bf16.mxu0 %v985
      %1123 = vmatpush1.bf16.msra.mxu0 %v984
      %1124 = vmatprep.subr.bf16.mxu0 %v983
      %1125 = vmatpush1.bf16.msra.mxu0 %v982
      %1126 = vmatprep.subr.bf16.mxu0 %v981
      %1127 = vmatpush1.bf16.msra.mxu0 %v980
      %1128 = vmatprep.subr.bf16.mxu0 0
      %1129 = vmatpush2.bf16.msra.mxu0 0
      %1130 = vmatprep.subr.bf16.mxu0 0
      %1131 = vmatpush2.bf16.msra.mxu0 0
      %1132 = vmatprep.subr.bf16.mxu0 %v1110
      %1133 = vmatpush2.bf16.msra.mxu0 %v1107
      %1134 = vmatprep.subr.bf16.mxu0 %v1005
      %1135 = vmatpush2.bf16.msra.mxu0 %v1004
      %1136 = vmatprep.subr.bf16.mxu0 %v1003
      %1137 = vmatpush2.bf16.msra.mxu0 %v1002
      %1138 = vmatprep.subr.bf16.mxu0 %v1001
      %1139 = vmatpush2.bf16.msra.mxu0 %v1000
      %1140 = vmatprep.subr.bf16.mxu0 %v999
      %1141 = vmatpush2.bf16.msra.mxu0 %v998
      %1142 = vmatprep.subr.bf16.mxu0 %v997
      %1143 = vmatpush2.bf16.msra.mxu0 %v996
      %1144 = vmatprep.mubr.bf16.mxu0 %v1094
      %1145 = vmatmul.mubr.bf16.gmra.mxu0 %v1080
      %v1146 = vpop.f32.mrf.mxu0
      %v1147 = vadd.f32 %v1019, %v1146
      %v1148 = vpop.f32.mrf.mxu0
      %v1149 = vadd.f32 %v1019, %v1148
      %v1150 = vpop.f32.mrf.mxu0
      %v1151 = vadd.f32 %v1024, %v1150
      %v1152 = vpop.f32.mrf.mxu0
      %v1153 = vadd.f32 %v1024, %v1152
      %1154 = vmatprep.mubr.bf16.mxu0 %v1097
      %1155 = vmatmul.mubr.bf16.gmra.mxu0 %v1082
      %v1156 = vpop.f32.mrf.mxu0
      %v1157 = vadd.f32 %v1029, %v1156
      %v1158 = vpop.f32.mrf.mxu0
      %v1159 = vadd.f32 %v1029, %v1158
      %v1160 = vpop.f32.mrf.mxu0
      %v1161 = vadd.f32 %v1034, %v1160
      %v1162 = vpop.f32.mrf.mxu0
      %v1163 = vadd.f32 %v1034, %v1162
      %1164 = vmatprep.mubr.bf16.mxu0 %v1100
      %1165 = vmatmul.mubr.bf16.gmra.mxu0 %v1084
      %v1166 = vpop.f32.mrf.mxu0
      %v1167 = vadd.f32 %v1039, %v1166
      %v1168 = vpop.f32.mrf.mxu0
      %v1169 = vadd.f32 %v1039, %v1168
      %v1170 = vpop.f32.mrf.mxu0
      %v1171 = vadd.f32 %v1044, %v1170
      %v1172 = vpop.f32.mrf.mxu0
      %v1173 = vadd.f32 %v1044, %v1172
      %1174 = vmatprep.mubr.bf16.mxu0 %v1103
      %1175 = vmatmul.mubr.bf16.gmra.mxu0 %v1086
      %v1176 = vpop.f32.mrf.mxu0
      %v1177 = vadd.f32 %v1049, %v1176
      %v1178 = vpop.f32.mrf.mxu0
      %v1179 = vadd.f32 %v1049, %v1178
      %v1180 = vpop.f32.mrf.mxu0
      %v1181 = vadd.f32 %v1054, %v1180
      %v1182 = vpop.f32.mrf.mxu0
      %v1183 = vadd.f32 %v1054, %v1182
      %1184 = vdwg.mxu0
      %v1185 = vld [vmem:[#allocation3] sm:$0xff]
      %v1186 = vld [vmem:[#allocation3 + $0x8] sm:$0xff]
      %v1187 = vld [vmem:[#allocation3 + $0x10] sm:$0xff]
      %v1188 = vld [vmem:[#allocation3 + $0x18] sm:$0xff]
      %v1189 = vxor.u32 %v1147, 2147483648
      %v1190 = vxor.u32 %v1149, 2147483648
      %v1191 = vxor.u32 %v1151, 2147483648
      %v1192 = vxor.u32 %v1153, 2147483648
      %v1193 = vmul.f32 %v1189, 1.442695
      %v1194 = vpow.pop %v1193
      %v1195 = vmul.f32 %v1190, 1.442695
      %v1196 = vpow.pop %v1195
      %v1197 = vmul.f32 %v1191, 1.442695
      %v1198 = vpow.pop %v1197
      %v1199 = vmul.f32 %v1192, 1.442695
      %v1200 = vpow.pop %v1199
      %v1201 = vadd.f32 %v1194, 1.0
      %v1202 = vadd.f32 %v1196, 1.0
      %v1203 = vadd.f32 %v1198, 1.0
      %v1204 = vadd.f32 %v1200, 1.0
      %v1205 = vrcp.pop %v1201
      %v1206 = vmul.f32 1.0, %v1205
      %v1207 = vrcp.pop %v1202
      %v1208 = vmul.f32 1.0, %v1207
      %v1209 = vrcp.pop %v1203
      %v1210 = vmul.f32 1.0, %v1209
      %v1211 = vrcp.pop %v1204
      %v1212 = vmul.f32 1.0, %v1211
      %v1213 = vxor.u32 %v1157, 2147483648
      %v1214 = vxor.u32 %v1159, 2147483648
      %v1215 = vxor.u32 %v1161, 2147483648
      %v1216 = vxor.u32 %v1163, 2147483648
      %v1217 = vmul.f32 %v1213, 1.442695
      %v1218 = vpow.pop %v1217
      %v1219 = vmul.f32 %v1214, 1.442695
      %v1220 = vpow.pop %v1219
      %v1221 = vmul.f32 %v1215, 1.442695
      %v1222 = vpow.pop %v1221
      %v1223 = vmul.f32 %v1216, 1.442695
      %v1224 = vpow.pop %v1223
      %v1225 = vadd.f32 %v1218, 1.0
      %v1226 = vadd.f32 %v1220, 1.0
      %v1227 = vadd.f32 %v1222, 1.0
      %v1228 = vadd.f32 %v1224, 1.0
      %v1229 = vrcp.pop %v1225
      %v1230 = vmul.f32 1.0, %v1229
      %v1231 = vrcp.pop %v1226
      %v1232 = vmul.f32 1.0, %v1231
      %v1233 = vrcp.pop %v1227
      %v1234 = vmul.f32 1.0, %v1233
      %v1235 = vrcp.pop %v1228
      %v1236 = vmul.f32 1.0, %v1235
      %v1237 = vmul.f32 %v1230, %v1185
      %v1238 = vmul.f32 %v1232, %v1186
      %v1239 = vmul.f32 %v1234, %v1187
      %v1240 = vmul.f32 %v1236, %v1188
      %v1241 = vtanh.pop %v1167
      %v1242 = vtanh.pop %v1169
      %v1243 = vtanh.pop %v1171
      %v1244 = vtanh.pop %v1173
      %v1245 = vmul.f32 %v1206, %v1241
      %v1246 = vmul.f32 %v1208, %v1242
      %v1247 = vmul.f32 %v1210, %v1243
      %v1248 = vmul.f32 %v1212, %v1244
      %v1249 = vadd.f32 %v1237, %v1245
      %v1250 = vadd.f32 %v1238, %v1246
      %v1251 = vadd.f32 %v1239, %v1247
      %v1252 = vadd.f32 %v1240, %v1248
      %v1253 = vxor.u32 %v1177, 2147483648
      %v1254 = vxor.u32 %v1179, 2147483648
      %v1255 = vxor.u32 %v1181, 2147483648
      %v1256 = vxor.u32 %v1183, 2147483648
      %v1257 = vmul.f32 %v1253, 1.442695
      %v1258 = vpow.pop %v1257
      %v1259 = vmul.f32 %v1254, 1.442695
      %v1260 = vpow.pop %v1259
      %v1261 = vmul.f32 %v1255, 1.442695
      %v1262 = vpow.pop %v1261
      %v1263 = vmul.f32 %v1256, 1.442695
      %v1264 = vpow.pop %v1263
      %v1265 = vadd.f32 %v1258, 1.0
      %v1266 = vadd.f32 %v1260, 1.0
      %v1267 = vadd.f32 %v1262, 1.0
      %v1268 = vadd.f32 %v1264, 1.0
      %v1269 = vrcp.pop %v1265
      %v1270 = vmul.f32 1.0, %v1269
      %v1271 = vrcp.pop %v1266
      %v1272 = vmul.f32 1.0, %v1271
      %v1273 = vrcp.pop %v1267
      %v1274 = vmul.f32 1.0, %v1273
      %v1275 = vrcp.pop %v1268
      %v1276 = vmul.f32 1.0, %v1275
      %v1277 = vtanh.pop %v1249
      %v1278 = vtanh.pop %v1250
      %v1279 = vtanh.pop %v1251
      %v1280 = vtanh.pop %v1252
      %v1281 = vmul.f32 %v1270, %v1277
      %v1282 = vmul.f32 %v1272, %v1278
      %v1283 = vmul.f32 %v1274, %v1279
      %v1284 = vmul.f32 %v1276, %v1280
      %1285 = vst [vmem:[#allocation3] sm:$0xff] %v1249
      %1286 = vst [vmem:[#allocation3 + $0x8] sm:$0xff] %v1250
      %1287 = vst [vmem:[#allocation3 + $0x10] sm:$0xff] %v1251
      %1288 = vst [vmem:[#allocation3 + $0x18] sm:$0xff] %v1252
      %1289 = vst [vmem:[#allocation2 + $0x8] sm:$0xff] %v1281
      %1290 = vst [vmem:[#allocation2 + $0x10] sm:$0xff] %v1282
      %1291 = vst [vmem:[#allocation2 + $0x28] sm:$0xff] %v1283
      %1292 = vst [vmem:[#allocation2 + $0x30] sm:$0xff] %v1284
      %1293 = vst [vmem:[%s362] sm:$0xff] %v1281
      %1294 = vst [vmem:[%s362 + $0x8] sm:$0xff] %v1282
      %1295 = vst [vmem:[%s362 + $0x10] sm:$0xff] %v1283
      %1296 = vst [vmem:[%s362 + $0x18] sm:$0xff] %v1284
      %1297 = vst [vmem:[%s367] sm:$0xff] %v1249
      %1298 = vst [vmem:[%s367 + $0x8] sm:$0xff] %v1250
      %1299 = vst [vmem:[%s367 + $0x10] sm:$0xff] %v1251
      %1300 = vst [vmem:[%s367 + $0x18] sm:$0xff] %v1252
      %p1301 = scmp.lt.s32.totalorder %s24, 7
      %s1302 = scalar_select %p1301, %s24, 7
      %p1303 = scmp.lt.s32.totalorder %s23, 1
      %s1304 = scalar_select %p1303, %s23, 1
      %s1305 = smul.addr %s1304, 4
      %s1306 = smul.addr %s1302, 8
      %s1307 = sadd.s32 %s1305, %s1306
      %s1308 = smul.addr %s1307, 8
      %s1309 = scalar_lea.vmem %s6, %s1308
      %p1310 = scmp.lt.s32.totalorder %s23, 1
      %s1311 = scalar_select %p1310, %s23, 1
      %s1312 = smul.addr %s1311, 4
      %s1313 = smul.addr %s1312, 8
      %s1314 = scalar_lea.vmem %s7, %s1313
      // Predicated region
      $region49: #{convlstm_forward_sequence.3} parent=43 // pred_check
        %p1315 = pneg %p194
      $region50: #{convlstm_forward_sequence.3} parent=43 // pred_check_branch
        %1317 = sbr.rel (%p1315) target = $region52
      $region51: #{convlstm_forward_sequence.3} parent=43 // pred_region
        _
      $region52: #{convlstm_forward_sequence.3} parent=43 // pred_fallthru
        _
      // Predicated region
      $region53: #{convlstm_forward_sequence.3} parent=43 // pred_check
        %p1318 = pneg %p220
      $region54: #{convlstm_forward_sequence.3} parent=43 // pred_check_branch
        %1320 = sbr.rel (%p1318) target = $region56
      $region55: #{convlstm_forward_sequence.3} parent=43 // pred_region
        _
      $region56: #{convlstm_forward_sequence.3} parent=43 // pred_fallthru
        _
    $region44: #{convlstm_forward_sequence.3} parent=5 // pred_fallthru
      _
    %p1321 = scmp.le.s32.totalorder 2, %s14
    // Predicated region
    $region57: #{convlstm_forward_sequence.3} parent=5 // pred_check
      %p1322 = pneg %p1321
    $region58: #{convlstm_forward_sequence.3} parent=5 // pred_check_branch
      %1324 = sbr.rel (%p1322) target = $region60
    $region59: #{convlstm_forward_sequence.3} parent=5 // pred_region
      %s1325 = ssub.s32 %s14, 2
      // Predicated region
      $region61: #{convlstm_forward_sequence.3} parent=59 // pred_check
        %p1326 = pneg %p200
      $region62: #{convlstm_forward_sequence.3} parent=59 // pred_check_branch
        %1328 = sbr.rel (%p1326) target = $region64
      $region63: #{convlstm_forward_sequence.3} parent=59 // pred_region
        %p1329 = scmp.lt.s32.totalorder %s26, 7
        %s1330 = scalar_select %p1329, %s26, 7
        %p1331 = scmp.lt.s32.totalorder %s25, 1
        %s1332 = scalar_select %p1331, %s25, 1
        %s1333 = smul.addr %s1332, 4
        %s1334 = smul.addr %s1330, 8
        %s1335 = sadd.s32 %s1333, %s1334
        %s1336 = smul.addr %s1335, 8
        %s1337 = scalar_lea.vmem %s6, %s1336
      $region64: #{convlstm_forward_sequence.3} parent=59 // pred_fallthru
        _
      // Predicated region
      $region65: #{convlstm_forward_sequence.3} parent=59 // pred_check
        %p1338 = pneg %p226
      $region66: #{convlstm_forward_sequence.3} parent=59 // pred_check_branch
        %1340 = sbr.rel (%p1338) target = $region68
      $region67: #{convlstm_forward_sequence.3} parent=59 // pred_region
        %p1341 = scmp.lt.s32.totalorder %s25, 1
        %s1342 = scalar_select %p1341, %s25, 1
        %s1343 = smul.addr %s1342, 4
        %s1344 = smul.addr %s1343, 8
        %s1345 = scalar_lea.vmem %s7, %s1344
      $region68: #{convlstm_forward_sequence.3} parent=59 // pred_fallthru
        _
    $region60: #{convlstm_forward_sequence.3} parent=5 // pred_fallthru
      _
  $region6: #{convlstm_forward_sequence.3} parent=0 // loop_footer
    %s18 = sadd.s32 1, %s14
  $region7: #{convlstm_forward_sequence.3} parent=0 // loop_footer_branch
    %13 = sbr.rel target = $region3
  $region8: #{convlstm_forward_sequence.3} parent=0 // loop_exit
    _

</llo_original>
